<compile_context>
chip_gen: v7x
topology: tpu7x:2x2x1
jax: 0.10.0
libtpu: 0.0.40
codegen_flags: <defaults>
</compile_context>

<pallas_src>
import functools

import jax
import jax.numpy as jnp
from jax import lax
from jax.experimental import pallas as pl
from jax.experimental.pallas import tpu as pltpu


_NEG = -1e30            # max-pool pad; invariants asserted in adown_forward
_ACC_BYTES = 128 * 1024  # target f32 accumulator footprint per spatial tile


def _round_up(a, b):
    return -(-a // b) * b


# ------------------------------- Pallas kernel ------------------------------ #

def _adown_kernel(x_ref, w1_ref, w2_ref, b_ref, o_ref, *, stride, c_in, sig_dtype):
    """One (batch n, row-block r) tile of the fused ADown forward.

    x_ref : (s*s, Hb, Wb, c1) bf16 phase-split padded image, resident across the
            row-block grid axis.  [..., :c_in] conv half (0-padded),
            [..., c_in:] max-pool half (-1e30-padded).
    w1_ref: (9, c_in, c2) bf16, BN scale folded, columns [cout:] zero.
    w2_ref: (c_in, c2)    bf16, BN scale folded, columns [:cout] zero.
    b_ref : (1, c2) f32 folded BN bias (branch1 | branch2).
    o_ref : (1, th, Wt, c2) output tile (row-block r of image n).
    """
    s = stride
    th, Wt, c2 = o_ref.shape[1], o_ref.shape[2], o_ref.shape[3]
    M = th * Wt
    row0 = pl.program_id(1) * th            # first output row of this tile

    def tap(kh, kw, ch0):
        # Padded-input position (s*oh + kh, s*ow + kw) lives in phase plane
        # (kh % s, kw % s) at block offset (oh + kh//s, ow + kw//s): unit-stride
        # slice; only kw == 2 yields a sublane-offset slice.
        p = (kh % s) * s + (kw % s)
        return x_ref[p, pl.ds(row0 + kh // s, th), pl.ds(kw // s, Wt),
                     pl.ds(ch0, c_in)]

    # Branch 1: 3x3 strided conv as 9 shifted MXU matmuls (channel half [0:cout]).
    acc = jnp.zeros((M, c2), jnp.float32)   # th*Wt*c2*4B <= ~128 KB: stays in vregs
    for kh in range(3):
        for kw in range(3):
            lhs = tap(kh, kw, 0).reshape(M, c_in)       # free: Wt % 8 == 0
            acc = acc + jnp.dot(lhs, w1_ref[kh * 3 + kw],
                                preferred_element_type=jnp.float32)

    # Branch 2: 3x3 strided max-pool (VPU) then 1x1 conv (channel half [cout:]).
    pooled = tap(0, 0, c_in)
    for kh in range(3):
        for kw in range(3):
            if (kh, kw) != (0, 0):
                pooled = jnp.maximum(pooled, tap(kh, kw, c_in))
    acc = acc + jnp.dot(pooled.reshape(M, c_in), w2_ref[...],
                        preferred_element_type=jnp.float32)

    # Folded-BN bias + SiLU epilogue (sigmoid in bf16 on v6e/v7x), lane-dense store.
    y = acc + b_ref[...]
    sig = jax.nn.sigmoid(y.astype(sig_dtype)).astype(jnp.float32)
    o_ref[...] = (y * sig).reshape(1, th, Wt, c2).astype(o_ref.dtype)


# ------------------------------ host-side glue ------------------------------ #

def _avg_pool_k_s1(x, k):
    # F.avg_pool2d(x, k, stride=1, padding=0, ceil_mode=False, count_include_pad=True)
    # TODO(synk): fold into the kernel; kept as XLA glue (see module docstring).
    if k == 1:
        return x
    N, C, H, W = x.shape
    Ho, Wo = H - k + 1, W - k + 1
    acc = jnp.zeros((N, C, Ho, Wo), x.dtype)
    for i in range(k):
        for j in range(k):
            acc = acc + x[:, :, i:i + Ho, j:j + Wo]
    return acc / float(k * k)


def _sigmoid_dtype():
    # bf16 EUP exists on v6e/v7x; keep f32 on earlier generations (no bf16 EUP).
    try:
        kind = jax.devices()[0].device_kind.lower()
    except Exception:
        return jnp.float32
    return jnp.bfloat16 if any(t in kind for t in ("v6", "v7", "7x")) else jnp.float32


def adown_forward(x, w1, w2, s1, b1, s2, b2, stride,
                  out_dtype=jnp.float32, nhwc_out=False):
    """ADown forward. x: (N, c1, H, W) f32, weights OIHW, BN pre-folded into
    (scale s*, bias b*).  Returns (N, c2, Ho, Wo) (or NHWC if nhwc_out=True)."""
    s = int(stride)
    N, c1, H, W = x.shape
    c_in = c1 // 2
    cout = w1.shape[0]
    c2 = 2 * cout
    assert c1 == 2 * c_in and w1.shape == (cout, c_in, 3, 3)
    # Channel-concat via disjoint zero-padded weight halves requires c2 == 2*cout.
    assert w2.shape == (cout, c_in, 1, 1) and c2 == 2 * cout

    # avg_pool(k=s, stride=1) pre-step (XLA glue).
    x = _avg_pool_k_s1(x, s)
    Ha, Wa = x.shape[2], x.shape[3]
    Ho = (Ha - 1) // s + 1                       # = (Ha + 2 - 3)//s + 1
    Wo = (Wa - 1) // s + 1

    # Tiling: keep the f32 accumulator inside the vreg file, sublane-align W.
    Wt = _round_up(Wo, 8)
    th = max(1, min(Ho, _ACC_BYTES // (Wt * c2 * 4)))
    R = pl.cdiv(Ho, th)
    Ho_pad = R * th

    extra = 2 // s                               # max kh//s over the 3x3 window
    Hb = max(Ho_pad + extra, pl.cdiv(Ha + 1, s))
    Wb = max(Wt + extra, pl.cdiv(Wa + 1, s))
    Hp, Wp = Hb * s, Wb * s

    # Max-pool pad invariants: every *valid* output's centre tap (kh=kw=1) reads
    # real data (so -1e30 never wins the max there) and no valid tap reads
    # outside the padded array.
    assert s * (Ho - 1) + 1 <= Ha and s * (Wo - 1) + 1 <= Wa
    assert s * (Ho - 1) + 2 <= Hp - 1 and s * (Wo - 1) + 2 <= Wp - 1
    assert Ho_pad + extra <= Hb and Wt + extra <= Wb

    # NCHW -> NHWC once; pad each branch half with its own constant; concat to
    # ONE merged input (half the DMA streams, fuller 128-lane tiles); phase-split
    # (space-to-depth, no 9x expansion) so every 3x3 tap is a unit-stride slice.
    x_nhwc = jnp.transpose(x, (0, 2, 3, 1))
    pad = ((0, 0), (1, Hp - 1 - Ha), (1, Wp - 1 - Wa), (0, 0))
    xp = jnp.concatenate(
        [jnp.pad(x_nhwc[..., :c_in], pad),                         # conv: 0-pad
         jnp.pad(x_nhwc[..., c_in:], pad, constant_values=_NEG)],  # pool: -1e30
        axis=-1).astype(jnp.bfloat16)
    xp = xp.reshape(N, Hb, s, Wb, s, c1).transpose(0, 2, 4, 1, 3, 5)
    xp = xp.reshape(N * s * s, Hb, Wb, c1)

    # Fold BN scale into weights; zero-pad the two weight matrices into disjoint
    # output-channel halves so the concat falls out of the shared accumulator.
    w1f = (w1 * s1[:, None, None, None]).transpose(2, 3, 1, 0).reshape(9, c_in, cout)
    w1cat = jnp.pad(w1f, ((0, 0), (0, 0), (0, cout))).astype(jnp.bfloat16)   # (9,C,c2)
    w2f = (w2[:, :, 0, 0] * s2[:, None]).T                                    # (C,cout)
    w2cat = jnp.pad(w2f, ((0, 0), (cout, 0))).astype(jnp.bfloat16)            # (C,c2)
    bias = jnp.concatenate([b1, b2])[None, :].astype(jnp.float32)             # (1,c2)

    # Explicit VMEM budget (v7x: 64 MiB physical; v5e: 16 MiB scoped default).
    out_itemsize = jnp.dtype(out_dtype).itemsize
    in_bytes = s * s * Hb * Wb * c1 * 2
    out_tile_bytes = th * Wt * c2 * out_itemsize
    w_bytes = (9 * c_in * c2 + c_in * c2) * 2 + c2 * 4
    vmem_need = 2 * in_bytes + 2 * out_tile_bytes + 2 * w_bytes + (4 << 20)
    vmem_limit = int(min(max(vmem_need, 32 << 20), 60 << 20))

    m_total = N * Ho_pad * Wt
    cost = pl.CostEstimate(
        flops=2 * m_total * 10 * c_in * c2,
        transcendentals=m_total * c2,
        bytes_accessed=N * in_bytes + N * R * out_tile_bytes + w_bytes,
    )

    kernel = functools.partial(_adown_kernel, stride=s, c_in=c_in,
                               sig_dtype=_sigmoid_dtype())
    out_padded = pl.pallas_call(
        kernel,
        out_shape=jax.ShapeDtypeStruct((N, Ho_pad, Wt, c2), out_dtype),
        grid=(N, R),
        in_specs=[
            # Whole phase-split image: block index depends only on n, so it is
            # DMA'd once per image and stays resident across the row-block axis.
            pl.BlockSpec((s * s, Hb, Wb, c1), lambda n, r: (n, 0, 0, 0)),
            # Constant-index weight/bias specs: fetched once across the grid.
            pl.BlockSpec((9, c_in, c2), lambda n, r: (0, 0, 0)),
            pl.BlockSpec((c_in, c2), lambda n, r: (0, 0)),
            pl.BlockSpec((1, c2), lambda n, r: (0, 0)),
        ],
        out_specs=pl.BlockSpec((1, th, Wt, c2), lambda n, r: (n, r, 0, 0)),
        compiler_params=pltpu.CompilerParams(
            dimension_semantics=("parallel", "parallel"),
            vmem_limit_bytes=vmem_limit),
        cost_estimate=cost,
    )(xp, w1cat, w2cat, bias)

    out = out_padded[:, :Ho, :Wo, :]             # crop row/col padding (cheap XLA)
    if nhwc_out:
        return out
    # TODO(synk): keep NHWC downstream and drop this full-tensor transpose.
    return jnp.transpose(out, (0, 3, 1, 2))


# ----------------------------- pure-JAX reference --------------------------- #

def adown_ref(x, w1, w2, s1, b1, s2, b2, stride):
    """Reference via lax conv / reduce_window; same bf16-operand / f32-accum
    choice as the kernel so the comparison is tight."""
    if stride > 1:
        x = lax.reduce_window(x, 0.0, lax.add, (1, 1, stride, stride),
                              (1, 1, 1, 1), "VALID") / float(stride * stride)
    c_in = x.shape[1] // 2
    dn = ("NCHW", "OIHW", "NCHW")
    w1f = (w1 * s1[:, None, None, None]).astype(jnp.bfloat16)
    w2f = (w2 * s2[:, None, None, None]).astype(jnp.bfloat16)

    x1 = x[:, :c_in].astype(jnp.bfloat16)
    y1 = lax.conv_general_dilated(x1, w1f, (stride, stride), ((1, 1), (1, 1)),
                                  dimension_numbers=dn,
                                  preferred_element_type=jnp.float32)
    y1 = y1 + b1[None, :, None, None]
    y1 = y1 * jax.nn.sigmoid(y1)

    x2p = lax.reduce_window(x[:, c_in:], -jnp.inf, lax.max, (1, 1, 3, 3),
                            (1, 1, stride, stride),
                            ((0, 0), (0, 0), (1, 1), (1, 1)))
    y2 = lax.conv_general_dilated(x2p.astype(jnp.bfloat16), w2f, (1, 1), "VALID",
                                  dimension_numbers=dn,
                                  preferred_element_type=jnp.float32)
    y2 = y2 + b2[None, :, None, None]
    y2 = y2 * jax.nn.sigmoid(y2)
    return jnp.concatenate([y1, y2], axis=1)


# ----------------------------------- main ----------------------------------- #

if __name__ == "__main__":
    N, c1, c2, H, W, stride = 2, 8, 8, 16, 16, 2
    c_half_in, c_half_out = c1 // 2, c2 // 2
    eps = 1e-5  # nn.BatchNorm2d default

    key = jax.random.PRNGKey(0)
    keys = jax.random.split(key, 11)
    x = jax.random.normal(keys[0], (N, c1, H, W), jnp.float32)

    # Deterministic synthetic parameters (module __init__ defines the shapes).
    w1 = jax.random.normal(keys[1], (c_half_out, c_half_in, 3, 3), jnp.float32) * 0.1
    w2 = jax.random.normal(keys[2], (c_half_out, c_half_in, 1, 1), jnp.float32) * 0.1

    def bn_fold(kg, kb, km, kv):
        gamma = 1.0 + 0.1 * jax.random.normal(kg, (c_half_out,), jnp.float32)
        beta = 0.1 * jax.random.normal(kb, (c_half_out,), jnp.float32)
        mean = 0.1 * jax.random.normal(km, (c_half_out,), jnp.float32)
        var = 0.9 + 0.1 * jnp.abs(jax.random.normal(kv, (c_half_out,), jnp.float32))
        scale = gamma / jnp.sqrt(var + eps)
        bias = beta - mean * scale
        return scale, bias

    s1, b1 = bn_fold(keys[3], keys[4], keys[5], keys[6])
    s2, b2 = bn_fold(keys[7], keys[8], keys[9], keys[10])

    out = adown_forward(x, w1, w2, s1, b1, s2, b2, stride)
    out = jax.block_until_ready(out)

    ref = adown_ref(x, w1, w2, s1, b1, s2, b2, stride)
    assert out.shape == ref.shape, (out.shape, ref.shape)
    # 3e-2 tolerance covers bf16 MXU operands + (on v6e/v7x) the bf16 sigmoid.
    assert bool(jnp.allclose(out, ref, atol=3e-2, rtol=3e-2)), "mismatch vs reference"

    print("KERNEL_OK")
</pallas_src>

<mosaic_0001>
module attributes {stable_mosaic.version = 11 : i64} {
  func.func @_adown_kernel(%arg0: i32, %arg1: i32, %arg2: memref<4x9x9x8xbf16, #tpu.memory_space<vmem>>, %arg3: memref<9x4x8xbf16, #tpu.memory_space<vmem>>, %arg4: memref<4x8xbf16, #tpu.memory_space<vmem>>, %arg5: memref<1x8xf32, #tpu.memory_space<vmem>>, %arg6: memref<1x8x8x8xf32, #tpu.memory_space<vmem>>) attributes {dimension_semantics = [#tpu.dimension_semantics<parallel>, #tpu.dimension_semantics<parallel>], iteration_bounds = array<i64: 2, 1>, scalar_prefetch = 0 : i64, scratch_operands = 0 : i64, tpu.core_type = #tpu.core_type<tc>, window_params = [{transform_indices = @transform_0, window_bounds = array<i64: 4, 9, 9, 8>}, {pipeline_mode = #tpu.pipeline_mode<synchronous>, transform_indices = @transform_1, window_bounds = array<i64: 9, 4, 8>}, {pipeline_mode = #tpu.pipeline_mode<synchronous>, transform_indices = @transform_2, window_bounds = array<i64: 4, 8>}, {pipeline_mode = #tpu.pipeline_mode<synchronous>, transform_indices = @transform_3, window_bounds = array<i64: 1, 8>}, {transform_indices = @transform_4, window_bounds = array<i64: 1, 8, 8, 8>}]} {
    %c8_i32 = arith.constant 8 : i32
    %0 = arith.muli %arg1, %c8_i32 : i32
    %cst = arith.constant 0.000000e+00 : f32
    %1 = vector.broadcast %cst : f32 to vector<64x8xf32>
    %c0_i32 = arith.constant 0 : i32
    %2 = arith.addi %0, %c0_i32 : i32
    %c0 = arith.constant 0 : index
    %3 = arith.index_cast %2 : i32 to index
    %c0_0 = arith.constant 0 : index
    %c0_1 = arith.constant 0 : index
    %4 = vector.load %arg2[%c0, %3, %c0_0, %c0_1] : memref<4x9x9x8xbf16, #tpu.memory_space<vmem>>, vector<1x8x8x4xbf16>
    %5 = vector.shape_cast %4 : vector<1x8x8x4xbf16> to vector<8x8x4xbf16>
    %6 = vector.shape_cast %5 : vector<8x8x4xbf16> to vector<64x4xbf16>
    %c0_2 = arith.constant 0 : index
    %c0_3 = arith.constant 0 : index
    %c0_4 = arith.constant 0 : index
    %7 = vector.load %arg3[%c0_2, %c0_3, %c0_4] : memref<9x4x8xbf16, #tpu.memory_space<vmem>>, vector<1x4x8xbf16>
    %8 = vector.shape_cast %7 : vector<1x4x8xbf16> to vector<4x8xbf16>
    %cst_5 = arith.constant dense<0.000000e+00> : vector<64x8xf32>
    %9 = tpu.matmul %6, %8, %cst_5 {dimension_numbers = #tpu.dot_dimension_numbers<[1], [0], [0], [1], [0, 0, 1, 1], [], []>} : vector<64x4xbf16>, vector<4x8xbf16>, vector<64x8xf32> -> vector<64x8xf32>
    %10 = arith.addf %1, %9 : vector<64x8xf32>
    %c0_i32_6 = arith.constant 0 : i32
    %11 = arith.addi %0, %c0_i32_6 : i32
    %c1 = arith.constant 1 : index
    %12 = arith.index_cast %11 : i32 to index
    %c0_7 = arith.constant 0 : index
    %c0_8 = arith.constant 0 : index
    %13 = vector.load %arg2[%c1, %12, %c0_7, %c0_8] : memref<4x9x9x8xbf16, #tpu.memory_space<vmem>>, vector<1x8x8x4xbf16>
    %14 = vector.shape_cast %13 : vector<1x8x8x4xbf16> to vector<8x8x4xbf16>
    %15 = vector.shape_cast %14 : vector<8x8x4xbf16> to vector<64x4xbf16>
    %c1_9 = arith.constant 1 : index
    %c0_10 = arith.constant 0 : index
    %c0_11 = arith.constant 0 : index
    %16 = vector.load %arg3[%c1_9, %c0_10, %c0_11] : memref<9x4x8xbf16, #tpu.memory_space<vmem>>, vector<1x4x8xbf16>
    %17 = vector.shape_cast %16 : vector<1x4x8xbf16> to vector<4x8xbf16>
    %cst_12 = arith.constant dense<0.000000e+00> : vector<64x8xf32>
    %18 = tpu.matmul %15, %17, %cst_12 {dimension_numbers = #tpu.dot_dimension_numbers<[1], [0], [0], [1], [0, 0, 1, 1], [], []>} : vector<64x4xbf16>, vector<4x8xbf16>, vector<64x8xf32> -> vector<64x8xf32>
    %19 = arith.addf %10, %18 : vector<64x8xf32>
    %c0_i32_13 = arith.constant 0 : i32
    %20 = arith.addi %0, %c0_i32_13 : i32
    %c0_14 = arith.constant 0 : index
    %21 = arith.index_cast %20 : i32 to index
    %c1_15 = arith.constant 1 : index
    %c0_16 = arith.constant 0 : index
    %22 = vector.load %arg2[%c0_14, %21, %c1_15, %c0_16] : memref<4x9x9x8xbf16, #tpu.memory_space<vmem>>, vector<1x8x8x4xbf16>
    %23 = vector.shape_cast %22 : vector<1x8x8x4xbf16> to vector<8x8x4xbf16>
    %24 = vector.shape_cast %23 : vector<8x8x4xbf16> to vector<64x4xbf16>
    %c2 = arith.constant 2 : index
    %c0_17 = arith.constant 0 : index
    %c0_18 = arith.constant 0 : index
    %25 = vector.load %arg3[%c2, %c0_17, %c0_18] : memref<9x4x8xbf16, #tpu.memory_space<vmem>>, vector<1x4x8xbf16>
    %26 = vector.shape_cast %25 : vector<1x4x8xbf16> to vector<4x8xbf16>
    %cst_19 = arith.constant dense<0.000000e+00> : vector<64x8xf32>
    %27 = tpu.matmul %24, %26, %cst_19 {dimension_numbers = #tpu.dot_dimension_numbers<[1], [0], [0], [1], [0, 0, 1, 1], [], []>} : vector<64x4xbf16>, vector<4x8xbf16>, vector<64x8xf32> -> vector<64x8xf32>
    %28 = arith.addf %19, %27 : vector<64x8xf32>
    %c0_i32_20 = arith.constant 0 : i32
    %29 = arith.addi %0, %c0_i32_20 : i32
    %c2_21 = arith.constant 2 : index
    %30 = arith.index_cast %29 : i32 to index
    %c0_22 = arith.constant 0 : index
    %c0_23 = arith.constant 0 : index
    %31 = vector.load %arg2[%c2_21, %30, %c0_22, %c0_23] : memref<4x9x9x8xbf16, #tpu.memory_space<vmem>>, vector<1x8x8x4xbf16>
    %32 = vector.shape_cast %31 : vector<1x8x8x4xbf16> to vector<8x8x4xbf16>
    %33 = vector.shape_cast %32 : vector<8x8x4xbf16> to vector<64x4xbf16>
    %c3 = arith.constant 3 : index
    %c0_24 = arith.constant 0 : index
    %c0_25 = arith.constant 0 : index
    %34 = vector.load %arg3[%c3, %c0_24, %c0_25] : memref<9x4x8xbf16, #tpu.memory_space<vmem>>, vector<1x4x8xbf16>
    %35 = vector.shape_cast %34 : vector<1x4x8xbf16> to vector<4x8xbf16>
    %cst_26 = arith.constant dense<0.000000e+00> : vector<64x8xf32>
    %36 = tpu.matmul %33, %35, %cst_26 {dimension_numbers = #tpu.dot_dimension_numbers<[1], [0], [0], [1], [0, 0, 1, 1], [], []>} : vector<64x4xbf16>, vector<4x8xbf16>, vector<64x8xf32> -> vector<64x8xf32>
    %37 = arith.addf %28, %36 : vector<64x8xf32>
    %c0_i32_27 = arith.constant 0 : i32
    %38 = arith.addi %0, %c0_i32_27 : i32
    %c3_28 = arith.constant 3 : index
    %39 = arith.index_cast %38 : i32 to index
    %c0_29 = arith.constant 0 : index
    %c0_30 = arith.constant 0 : index
    %40 = vector.load %arg2[%c3_28, %39, %c0_29, %c0_30] : memref<4x9x9x8xbf16, #tpu.memory_space<vmem>>, vector<1x8x8x4xbf16>
    %41 = vector.shape_cast %40 : vector<1x8x8x4xbf16> to vector<8x8x4xbf16>
    %42 = vector.shape_cast %41 : vector<8x8x4xbf16> to vector<64x4xbf16>
    %c4 = arith.constant 4 : index
    %c0_31 = arith.constant 0 : index
    %c0_32 = arith.constant 0 : index
    %43 = vector.load %arg3[%c4, %c0_31, %c0_32] : memref<9x4x8xbf16, #tpu.memory_space<vmem>>, vector<1x4x8xbf16>
    %44 = vector.shape_cast %43 : vector<1x4x8xbf16> to vector<4x8xbf16>
    %cst_33 = arith.constant dense<0.000000e+00> : vector<64x8xf32>
    %45 = tpu.matmul %42, %44, %cst_33 {dimension_numbers = #tpu.dot_dimension_numbers<[1], [0], [0], [1], [0, 0, 1, 1], [], []>} : vector<64x4xbf16>, vector<4x8xbf16>, vector<64x8xf32> -> vector<64x8xf32>
    %46 = arith.addf %37, %45 : vector<64x8xf32>
    %c0_i32_34 = arith.constant 0 : i32
    %47 = arith.addi %0, %c0_i32_34 : i32
    %c2_35 = arith.constant 2 : index
    %48 = arith.index_cast %47 : i32 to index
    %c1_36 = arith.constant 1 : index
    %c0_37 = arith.constant 0 : index
    %49 = vector.load %arg2[%c2_35, %48, %c1_36, %c0_37] : memref<4x9x9x8xbf16, #tpu.memory_space<vmem>>, vector<1x8x8x4xbf16>
    %50 = vector.shape_cast %49 : vector<1x8x8x4xbf16> to vector<8x8x4xbf16>
    %51 = vector.shape_cast %50 : vector<8x8x4xbf16> to vector<64x4xbf16>
    %c5 = arith.constant 5 : index
    %c0_38 = arith.constant 0 : index
    %c0_39 = arith.constant 0 : index
    %52 = vector.load %arg3[%c5, %c0_38, %c0_39] : memref<9x4x8xbf16, #tpu.memory_space<vmem>>, vector<1x4x8xbf16>
    %53 = vector.shape_cast %52 : vector<1x4x8xbf16> to vector<4x8xbf16>
    %cst_40 = arith.constant dense<0.000000e+00> : vector<64x8xf32>
    %54 = tpu.matmul %51, %53, %cst_40 {dimension_numbers = #tpu.dot_dimension_numbers<[1], [0], [0], [1], [0, 0, 1, 1], [], []>} : vector<64x4xbf16>, vector<4x8xbf16>, vector<64x8xf32> -> vector<64x8xf32>
    %55 = arith.addf %46, %54 : vector<64x8xf32>
    %c1_i32 = arith.constant 1 : i32
    %56 = arith.addi %0, %c1_i32 : i32
    %c0_41 = arith.constant 0 : index
    %57 = arith.index_cast %56 : i32 to index
    %c0_42 = arith.constant 0 : index
    %c0_43 = arith.constant 0 : index
    %58 = vector.load %arg2[%c0_41, %57, %c0_42, %c0_43] : memref<4x9x9x8xbf16, #tpu.memory_space<vmem>>, vector<1x8x8x4xbf16>
    %59 = vector.shape_cast %58 : vector<1x8x8x4xbf16> to vector<8x8x4xbf16>
    %60 = vector.shape_cast %59 : vector<8x8x4xbf16> to vector<64x4xbf16>
    %c6 = arith.constant 6 : index
    %c0_44 = arith.constant 0 : index
    %c0_45 = arith.constant 0 : index
    %61 = vector.load %arg3[%c6, %c0_44, %c0_45] : memref<9x4x8xbf16, #tpu.memory_space<vmem>>, vector<1x4x8xbf16>
    %62 = vector.shape_cast %61 : vector<1x4x8xbf16> to vector<4x8xbf16>
    %cst_46 = arith.constant dense<0.000000e+00> : vector<64x8xf32>
    %63 = tpu.matmul %60, %62, %cst_46 {dimension_numbers = #tpu.dot_dimension_numbers<[1], [0], [0], [1], [0, 0, 1, 1], [], []>} : vector<64x4xbf16>, vector<4x8xbf16>, vector<64x8xf32> -> vector<64x8xf32>
    %64 = arith.addf %55, %63 : vector<64x8xf32>
    %c1_i32_47 = arith.constant 1 : i32
    %65 = arith.addi %0, %c1_i32_47 : i32
    %c1_48 = arith.constant 1 : index
    %66 = arith.index_cast %65 : i32 to index
    %c0_49 = arith.constant 0 : index
    %c0_50 = arith.constant 0 : index
    %67 = vector.load %arg2[%c1_48, %66, %c0_49, %c0_50] : memref<4x9x9x8xbf16, #tpu.memory_space<vmem>>, vector<1x8x8x4xbf16>
    %68 = vector.shape_cast %67 : vector<1x8x8x4xbf16> to vector<8x8x4xbf16>
    %69 = vector.shape_cast %68 : vector<8x8x4xbf16> to vector<64x4xbf16>
    %c7 = arith.constant 7 : index
    %c0_51 = arith.constant 0 : index
    %c0_52 = arith.constant 0 : index
    %70 = vector.load %arg3[%c7, %c0_51, %c0_52] : memref<9x4x8xbf16, #tpu.memory_space<vmem>>, vector<1x4x8xbf16>
    %71 = vector.shape_cast %70 : vector<1x4x8xbf16> to vector<4x8xbf16>
    %cst_53 = arith.constant dense<0.000000e+00> : vector<64x8xf32>
    %72 = tpu.matmul %69, %71, %cst_53 {dimension_numbers = #tpu.dot_dimension_numbers<[1], [0], [0], [1], [0, 0, 1, 1], [], []>} : vector<64x4xbf16>, vector<4x8xbf16>, vector<64x8xf32> -> vector<64x8xf32>
    %73 = arith.addf %64, %72 : vector<64x8xf32>
    %c1_i32_54 = arith.constant 1 : i32
    %74 = arith.addi %0, %c1_i32_54 : i32
    %c0_55 = arith.constant 0 : index
    %75 = arith.index_cast %74 : i32 to index
    %c1_56 = arith.constant 1 : index
    %c0_57 = arith.constant 0 : index
    %76 = vector.load %arg2[%c0_55, %75, %c1_56, %c0_57] : memref<4x9x9x8xbf16, #tpu.memory_space<vmem>>, vector<1x8x8x4xbf16>
    %77 = vector.shape_cast %76 : vector<1x8x8x4xbf16> to vector<8x8x4xbf16>
    %78 = vector.shape_cast %77 : vector<8x8x4xbf16> to vector<64x4xbf16>
    %c8 = arith.constant 8 : index
    %c0_58 = arith.constant 0 : index
    %c0_59 = arith.constant 0 : index
    %79 = vector.load %arg3[%c8, %c0_58, %c0_59] : memref<9x4x8xbf16, #tpu.memory_space<vmem>>, vector<1x4x8xbf16>
    %80 = vector.shape_cast %79 : vector<1x4x8xbf16> to vector<4x8xbf16>
    %cst_60 = arith.constant dense<0.000000e+00> : vector<64x8xf32>
    %81 = tpu.matmul %78, %80, %cst_60 {dimension_numbers = #tpu.dot_dimension_numbers<[1], [0], [0], [1], [0, 0, 1, 1], [], []>} : vector<64x4xbf16>, vector<4x8xbf16>, vector<64x8xf32> -> vector<64x8xf32>
    %82 = arith.addf %73, %81 : vector<64x8xf32>
    %c0_i32_61 = arith.constant 0 : i32
    %83 = arith.addi %0, %c0_i32_61 : i32
    %c0_62 = arith.constant 0 : index
    %84 = arith.index_cast %83 : i32 to index
    %c0_63 = arith.constant 0 : index
    %c4_64 = arith.constant 4 : index
    %85 = vector.load %arg2[%c0_62, %84, %c0_63, %c4_64] : memref<4x9x9x8xbf16, #tpu.memory_space<vmem>>, vector<1x8x8x4xbf16>
    %86 = vector.shape_cast %85 : vector<1x8x8x4xbf16> to vector<8x8x4xbf16>
    %c0_i32_65 = arith.constant 0 : i32
    %87 = arith.addi %0, %c0_i32_65 : i32
    %c1_66 = arith.constant 1 : index
    %88 = arith.index_cast %87 : i32 to index
    %c0_67 = arith.constant 0 : index
    %c4_68 = arith.constant 4 : index
    %89 = vector.load %arg2[%c1_66, %88, %c0_67, %c4_68] : memref<4x9x9x8xbf16, #tpu.memory_space<vmem>>, vector<1x8x8x4xbf16>
    %90 = vector.shape_cast %89 : vector<1x8x8x4xbf16> to vector<8x8x4xbf16>
    %91 = arith.maximumf %86, %90 : vector<8x8x4xbf16>
    %c0_i32_69 = arith.constant 0 : i32
    %92 = arith.addi %0, %c0_i32_69 : i32
    %c0_70 = arith.constant 0 : index
    %93 = arith.index_cast %92 : i32 to index
    %c1_71 = arith.constant 1 : index
    %c4_72 = arith.constant 4 : index
    %94 = vector.load %arg2[%c0_70, %93, %c1_71, %c4_72] : memref<4x9x9x8xbf16, #tpu.memory_space<vmem>>, vector<1x8x8x4xbf16>
    %95 = vector.shape_cast %94 : vector<1x8x8x4xbf16> to vector<8x8x4xbf16>
    %96 = arith.maximumf %91, %95 : vector<8x8x4xbf16>
    %c0_i32_73 = arith.constant 0 : i32
    %97 = arith.addi %0, %c0_i32_73 : i32
    %c2_74 = arith.constant 2 : index
    %98 = arith.index_cast %97 : i32 to index
    %c0_75 = arith.constant 0 : index
    %c4_76 = arith.constant 4 : index
    %99 = vector.load %arg2[%c2_74, %98, %c0_75, %c4_76] : memref<4x9x9x8xbf16, #tpu.memory_space<vmem>>, vector<1x8x8x4xbf16>
    %100 = vector.shape_cast %99 : vector<1x8x8x4xbf16> to vector<8x8x4xbf16>
    %101 = arith.maximumf %96, %100 : vector<8x8x4xbf16>
    %c0_i32_77 = arith.constant 0 : i32
    %102 = arith.addi %0, %c0_i32_77 : i32
    %c3_78 = arith.constant 3 : index
    %103 = arith.index_cast %102 : i32 to index
    %c0_79 = arith.constant 0 : index
    %c4_80 = arith.constant 4 : index
    %104 = vector.load %arg2[%c3_78, %103, %c0_79, %c4_80] : memref<4x9x9x8xbf16, #tpu.memory_space<vmem>>, vector<1x8x8x4xbf16>
    %105 = vector.shape_cast %104 : vector<1x8x8x4xbf16> to vector<8x8x4xbf16>
    %106 = arith.maximumf %101, %105 : vector<8x8x4xbf16>
    %c0_i32_81 = arith.constant 0 : i32
    %107 = arith.addi %0, %c0_i32_81 : i32
    %c2_82 = arith.constant 2 : index
    %108 = arith.index_cast %107 : i32 to index
    %c1_83 = arith.constant 1 : index
    %c4_84 = arith.constant 4 : index
    %109 = vector.load %arg2[%c2_82, %108, %c1_83, %c4_84] : memref<4x9x9x8xbf16, #tpu.memory_space<vmem>>, vector<1x8x8x4xbf16>
    %110 = vector.shape_cast %109 : vector<1x8x8x4xbf16> to vector<8x8x4xbf16>
    %111 = arith.maximumf %106, %110 : vector<8x8x4xbf16>
    %c1_i32_85 = arith.constant 1 : i32
    %112 = arith.addi %0, %c1_i32_85 : i32
    %c0_86 = arith.constant 0 : index
    %113 = arith.index_cast %112 : i32 to index
    %c0_87 = arith.constant 0 : index
    %c4_88 = arith.constant 4 : index
    %114 = vector.load %arg2[%c0_86, %113, %c0_87, %c4_88] : memref<4x9x9x8xbf16, #tpu.memory_space<vmem>>, vector<1x8x8x4xbf16>
    %115 = vector.shape_cast %114 : vector<1x8x8x4xbf16> to vector<8x8x4xbf16>
    %116 = arith.maximumf %111, %115 : vector<8x8x4xbf16>
    %c1_i32_89 = arith.constant 1 : i32
    %117 = arith.addi %0, %c1_i32_89 : i32
    %c1_90 = arith.constant 1 : index
    %118 = arith.index_cast %117 : i32 to index
    %c0_91 = arith.constant 0 : index
    %c4_92 = arith.constant 4 : index
    %119 = vector.load %arg2[%c1_90, %118, %c0_91, %c4_92] : memref<4x9x9x8xbf16, #tpu.memory_space<vmem>>, vector<1x8x8x4xbf16>
    %120 = vector.shape_cast %119 : vector<1x8x8x4xbf16> to vector<8x8x4xbf16>
    %121 = arith.maximumf %116, %120 : vector<8x8x4xbf16>
    %c1_i32_93 = arith.constant 1 : i32
    %122 = arith.addi %0, %c1_i32_93 : i32
    %c0_94 = arith.constant 0 : index
    %123 = arith.index_cast %122 : i32 to index
    %c1_95 = arith.constant 1 : index
    %c4_96 = arith.constant 4 : index
    %124 = vector.load %arg2[%c0_94, %123, %c1_95, %c4_96] : memref<4x9x9x8xbf16, #tpu.memory_space<vmem>>, vector<1x8x8x4xbf16>
    %125 = vector.shape_cast %124 : vector<1x8x8x4xbf16> to vector<8x8x4xbf16>
    %126 = arith.maximumf %121, %125 : vector<8x8x4xbf16>
    %127 = vector.shape_cast %126 : vector<8x8x4xbf16> to vector<64x4xbf16>
    %c0_97 = arith.constant 0 : index
    %c0_98 = arith.constant 0 : index
    %128 = vector.load %arg4[%c0_97, %c0_98] : memref<4x8xbf16, #tpu.memory_space<vmem>>, vector<4x8xbf16>
    %cst_99 = arith.constant dense<0.000000e+00> : vector<64x8xf32>
    %129 = tpu.matmul %127, %128, %cst_99 {dimension_numbers = #tpu.dot_dimension_numbers<[1], [0], [0], [1], [0, 0, 1, 1], [], []>} : vector<64x4xbf16>, vector<4x8xbf16>, vector<64x8xf32> -> vector<64x8xf32>
    %130 = arith.addf %82, %129 : vector<64x8xf32>
    %c0_100 = arith.constant 0 : index
    %c0_101 = arith.constant 0 : index
    %131 = vector.load %arg5[%c0_100, %c0_101] : memref<1x8xf32, #tpu.memory_space<vmem>>, vector<1x8xf32>
    %132 = vector.broadcast %131 : vector<1x8xf32> to vector<64x8xf32>
    %133 = arith.addf %130, %132 : vector<64x8xf32>
    %134 = arith.negf %133 : vector<64x8xf32>
    %135 = math.exp %134 : vector<64x8xf32>
    %cst_102 = arith.constant 1.000000e+00 : f32
    %136 = vector.broadcast %cst_102 : f32 to vector<64x8xf32>
    %137 = arith.addf %136, %135 : vector<64x8xf32>
    %138 = arith.divf %136, %137 : vector<64x8xf32>
    %139 = arith.mulf %133, %138 : vector<64x8xf32>
    %140 = vector.shape_cast %139 : vector<64x8xf32> to vector<1x8x8x8xf32>
    %c0_103 = arith.constant 0 : index
    %c0_104 = arith.constant 0 : index
    %c0_105 = arith.constant 0 : index
    %c0_106 = arith.constant 0 : index
    %141 = vector.load %arg6[%c0_103, %c0_104, %c0_105, %c0_106] : memref<1x8x8x8xf32, #tpu.memory_space<vmem>>, vector<1x8x8x8xf32>
    tpu.vector_store %arg6[%c0_103, %c0_104, %c0_105, %c0_106], %140 {strides = array<i32>} : memref<1x8x8x8xf32, #tpu.memory_space<vmem>>, vector<1x8x8x8xf32>,
    return
  }
  func.func @transform_0(%arg0: i32, %arg1: i32) -> (i32, i32, i32, i32) {
    %c0_i32 = arith.constant 0 : i32
    %c0_i32_0 = arith.constant 0 : i32
    %c0_i32_1 = arith.constant 0 : i32
    %c0_i32_2 = arith.constant 0 : i32
    return %arg0, %c0_i32, %c0_i32_0, %c0_i32_1 : i32, i32, i32, i32
  }
  func.func @transform_1(%arg0: i32, %arg1: i32) -> (i32, i32, i32) {
    %c0_i32 = arith.constant 0 : i32
    %c0_i32_0 = arith.constant 0 : i32
    %c0_i32_1 = arith.constant 0 : i32
    %c0_i32_2 = arith.constant 0 : i32
    return %c0_i32, %c0_i32_0, %c0_i32_1 : i32, i32, i32
  }
  func.func @transform_2(%arg0: i32, %arg1: i32) -> (i32, i32) {
    %c0_i32 = arith.constant 0 : i32
    %c0_i32_0 = arith.constant 0 : i32
    %c0_i32_1 = arith.constant 0 : i32
    return %c0_i32, %c0_i32_0 : i32, i32
  }
  func.func @transform_3(%arg0: i32, %arg1: i32) -> (i32, i32) {
    %c0_i32 = arith.constant 0 : i32
    %c0_i32_0 = arith.constant 0 : i32
    %c0_i32_1 = arith.constant 0 : i32
    return %c0_i32, %c0_i32_0 : i32, i32
  }
  func.func @transform_4(%arg0: i32, %arg1: i32) -> (i32, i32, i32, i32) {
    %c0_i32 = arith.constant 0 : i32
    %c0_i32_0 = arith.constant 0 : i32
    %c0_i32_1 = arith.constant 0 : i32
    return %arg0, %arg1, %c0_i32, %c0_i32_0 : i32, i32, i32, i32
  }
}

</mosaic_0001>

<llo_original>
// kernel: tpu_custom_call.1
$region0: #{tpu_custom_call.1}
  #allocation0 [shape = 'u32[]', space=smem, size = 0x4, offset = 0x4, fixed_abs, tag = 'smem constant byte address 0x4 - core index']
  #allocation1 [shape = 'u32[144,128]{1,0:T(1,128)}', space=vmem, size = 0x12000, scoped, tag = 'internal scratch']
  %s0 = inlined_call_operand.vmem [shape: bf16[8,9,9,8], index: 0, kind: input, shape index: {}]
  %s1 = inlined_call_operand.vmem [shape: bf16[9,4,8], index: 1, kind: input, shape index: {}]
  %s2 = inlined_call_operand.vmem [shape: bf16[4,8], index: 2, kind: input, shape index: {}]
  %s3 = inlined_call_operand.vmem [shape: f32[1,8], index: 3, kind: input, shape index: {}]
  %s4 = inlined_call_operand.hbm [shape: f32[2,8,8,8], index: 4, kind: output, shape index: {}]
  %s5 = sld [smem:[#allocation0]]
  $region49: #{tpu_custom_call.1} parent=0
    _
  %s7 = ssub.s32 1, %s5
  %s8 = scalar_select 0, %s7, %s5
  $region1: #{tpu_custom_call.1} parent=0
    #allocation2 [shape = 'u8[65536]{0}', space=vmem, size = 0x10000, scoped, tag = 'output window, operand 0']
    #allocation3 [shape = 's32[2]{0}', space=sflag, size = 0x8, scoped, tag = 'scoped memory for tpu_custom_call.1']
    %9 = vsyncpa [#allocation3], 0
    %s10 = scalar_lea.sflag [#allocation3], 1
    %11 = vsyncpa %s10, 0
    loop: start=0, step=1, limit=4
    $region2: #{tpu_custom_call.1} parent=1 // loop_pre_header
      _
    $region3: #{tpu_custom_call.1} parent=1 // loop_header
      %s13 = sphi 0, %s17
      %p14 = scmp.ge.s32.totalorder %s13, 4
      %s20 = sphi 0, %s32
      %s21 = sphi 0, %s28
      %s22 = sphi 0, %s20
      %s23 = sphi 0, %s21
      %s24 = sphi 0, %s22
      %s25 = sphi 0, %s23
      %s35 = sphi 0, %s37
      %s38 = sphi 0, %s35
      %s39 = sphi 0, %s38
      %s55 = sphi 0, %s39
      %s59 = sphi 0, %s59
      %s61 = sphi 0, %s59
      %s62 = sphi 0, %s61
      %s76 = sphi 0, %s62
      %s80 = sphi 0, %s80
      %s82 = sphi 0, %s80
      %s83 = sphi 0, %s82
      %s97 = sphi 0, %s83
      %s101 = sphi 0, %s101
      %s103 = sphi 0, %s101
      %s104 = sphi 0, %s103
      %s118 = sphi 0, %s104
      %s126 = sphi 0, %s128
      %s129 = sphi 0, %s126
      %s130 = sphi 0, %s129
      %s146 = sphi 0, %s130
    $region4: #{tpu_custom_call.1} parent=1 // loop_header_branch
      %16 = sbr.rel (%p14) target = $region8
    $region5: #{tpu_custom_call.1} parent=1 // loop_body
      %s18 = ssub.s32 %s13, 1
      %s19 = ssub.s32 %s13, 2
      %s26 = sadd.s32 1, %s21
      %p27 = scmp.ge.s32.totalorder %s26, 1
      %s28 = scalar_select %p27, 0, %s26
      %s29 = sadd.s32 1, %s20
      %s30 = scalar_select %p27, %s29, %s20
      %p31 = scmp.ge.s32.totalorder %s30, 2
      %s32 = scalar_select %p31, 0, %s30
      %s33 = ssub.s32 %s20, %s32
      %p34 = scmp.eq.s32.totalorder %s33, 0
      %s36 = sadd.s32 %s35, 1
      %s37 = scalar_select %p34, %s35, %s36
      %p40 = pneg %p34
      %p41 = scmp.eq.s32.totalorder %s13, 1
      %p42 = por %p40, %p41
      %p43 = scmp.ne.s32.totalorder %s35, %s38
      %p44 = scmp.eq.s32.totalorder %s13, 0
      %p45 = por %p43, %p44
      %p46 = scmp.ne.s32.totalorder %s35, %s38
      %p47 = scmp.eq.s32.totalorder %s18, 1
      %p48 = por %p46, %p47
      %p49 = scmp.ne.s32.totalorder %s38, %s39
      %p50 = scmp.eq.s32.totalorder %s18, 0
      %p51 = por %p49, %p50
      %p52 = scmp.ne.s32.totalorder %s38, %s39
      %p53 = scmp.eq.s32.totalorder %s19, 1
      %p54 = por %p52, %p53
      %p56 = scmp.ne.s32.totalorder %s39, %s55
      %p57 = scmp.eq.s32.totalorder %s19, 0
      %p58 = por %p56, %p57
      %s60 = sadd.s32 %s59, 1
      %p63 = scmp.eq.s32.totalorder %s13, 1
      %p64 = scmp.ne.s32.totalorder %s59, %s61
      %p65 = scmp.eq.s32.totalorder %s13, 0
      %p66 = por %p64, %p65
      %p67 = scmp.ne.s32.totalorder %s59, %s61
      %p68 = scmp.eq.s32.totalorder %s18, 1
      %p69 = por %p67, %p68
      %p70 = scmp.ne.s32.totalorder %s61, %s62
      %p71 = scmp.eq.s32.totalorder %s18, 0
      %p72 = por %p70, %p71
      %p73 = scmp.ne.s32.totalorder %s61, %s62
      %p74 = scmp.eq.s32.totalorder %s19, 1
      %p75 = por %p73, %p74
      %p77 = scmp.ne.s32.totalorder %s62, %s76
      %p78 = scmp.eq.s32.totalorder %s19, 0
      %p79 = por %p77, %p78
      %s81 = sadd.s32 %s80, 1
      %p84 = scmp.eq.s32.totalorder %s13, 1
      %p85 = scmp.ne.s32.totalorder %s80, %s82
      %p86 = scmp.eq.s32.totalorder %s13, 0
      %p87 = por %p85, %p86
      %p88 = scmp.ne.s32.totalorder %s80, %s82
      %p89 = scmp.eq.s32.totalorder %s18, 1
      %p90 = por %p88, %p89
      %p91 = scmp.ne.s32.totalorder %s82, %s83
      %p92 = scmp.eq.s32.totalorder %s18, 0
      %p93 = por %p91, %p92
      %p94 = scmp.ne.s32.totalorder %s82, %s83
      %p95 = scmp.eq.s32.totalorder %s19, 1
      %p96 = por %p94, %p95
      %p98 = scmp.ne.s32.totalorder %s83, %s97
      %p99 = scmp.eq.s32.totalorder %s19, 0
      %p100 = por %p98, %p99
      %s102 = sadd.s32 %s101, 1
      %p105 = scmp.eq.s32.totalorder %s13, 1
      %p106 = scmp.ne.s32.totalorder %s101, %s103
      %p107 = scmp.eq.s32.totalorder %s13, 0
      %p108 = por %p106, %p107
      %p109 = scmp.ne.s32.totalorder %s101, %s103
      %p110 = scmp.eq.s32.totalorder %s18, 1
      %p111 = por %p109, %p110
      %p112 = scmp.ne.s32.totalorder %s103, %s104
      %p113 = scmp.eq.s32.totalorder %s18, 0
      %p114 = por %p112, %p113
      %p115 = scmp.ne.s32.totalorder %s103, %s104
      %p116 = scmp.eq.s32.totalorder %s19, 1
      %p117 = por %p115, %p116
      %p119 = scmp.ne.s32.totalorder %s104, %s118
      %p120 = scmp.eq.s32.totalorder %s19, 0
      %p121 = por %p119, %p120
      %s122 = ssub.s32 %s20, %s32
      %s123 = ssub.s32 %s21, %s28
      %s124 = sor.u32 %s122, %s123
      %p125 = scmp.eq.s32.totalorder %s124, 0
      %s127 = sadd.s32 %s126, 1
      %s128 = scalar_select %p125, %s126, %s127
      %p131 = pneg %p125
      %p132 = scmp.eq.s32.totalorder %s13, 1
      %p133 = por %p131, %p132
      %p134 = scmp.ne.s32.totalorder %s126, %s129
      %p135 = scmp.eq.s32.totalorder %s13, 0
      %p136 = por %p134, %p135
      %p137 = scmp.ne.s32.totalorder %s126, %s129
      %p138 = scmp.eq.s32.totalorder %s18, 1
      %p139 = por %p137, %p138
      %p140 = scmp.ne.s32.totalorder %s129, %s130
      %p141 = scmp.eq.s32.totalorder %s18, 0
      %p142 = por %p140, %p141
      %p143 = scmp.ne.s32.totalorder %s129, %s130
      %p144 = scmp.eq.s32.totalorder %s19, 1
      %p145 = por %p143, %p144
      %p147 = scmp.ne.s32.totalorder %s130, %s146
      %p148 = scmp.eq.s32.totalorder %s19, 0
      %p149 = por %p147, %p148
      %p150 = scmp.le.s32.totalorder 1, %s13
      %p151 = scmp.lt.s32.totalorder %s13, 3
      %p152 = pnand %p150, %p151
      %p153 = pneg %p152
      // Predicated region
      $region9: #{tpu_custom_call.1} parent=5 // pred_check
        _
      $region10: #{tpu_custom_call.1} parent=5 // pred_check_branch
        %155 = sbr.rel (%p152) target = $region12
      $region11: #{tpu_custom_call.1} parent=5 // pred_region
        %s156 = ssub.s32 %s13, 1
        // Predicated region
        $region13: #{tpu_custom_call.1} parent=11 // pred_check
          %p157 = pneg %p72
        $region14: #{tpu_custom_call.1} parent=11 // pred_check_branch
          %159 = sbr.rel (%p157) target = $region16
        $region15: #{tpu_custom_call.1} parent=11 // pred_region
          _
        $region16: #{tpu_custom_call.1} parent=11 // pred_fallthru
          _
        // Predicated region
        $region17: #{tpu_custom_call.1} parent=11 // pred_check
          %p160 = pneg %p93
        $region18: #{tpu_custom_call.1} parent=11 // pred_check_branch
          %162 = sbr.rel (%p160) target = $region20
        $region19: #{tpu_custom_call.1} parent=11 // pred_region
          _
        $region20: #{tpu_custom_call.1} parent=11 // pred_fallthru
          _
        // Predicated region
        $region21: #{tpu_custom_call.1} parent=11 // pred_check
          %p163 = pneg %p114
        $region22: #{tpu_custom_call.1} parent=11 // pred_check_branch
          %165 = sbr.rel (%p163) target = $region24
        $region23: #{tpu_custom_call.1} parent=11 // pred_region
          _
        $region24: #{tpu_custom_call.1} parent=11 // pred_fallthru
          _
      $region12: #{tpu_custom_call.1} parent=5 // pred_fallthru
        _
      %p166 = scmp.lt.s32.totalorder %s13, 2
      // Predicated region
      $region25: #{tpu_custom_call.1} parent=5 // pred_check
        %p167 = pneg %p166
      $region26: #{tpu_custom_call.1} parent=5 // pred_check_branch
        %169 = sbr.rel (%p167) target = $region28
      $region27: #{tpu_custom_call.1} parent=5 // pred_region
        // Predicated region
        $region29: #{tpu_custom_call.1} parent=27 // pred_check
          %p170 = pneg %p45
        $region30: #{tpu_custom_call.1} parent=27 // pred_check_branch
          %172 = sbr.rel (%p170) target = $region32
        $region31: #{tpu_custom_call.1} parent=27 // pred_region
          %s173 = smul.u32 4, %s20
          %p174 = scmp.lt.s32.totalorder %s173, 7
          %s175 = scalar_select %p174, %s173, 7
          %s176 = smul.addr %s175, 18
          %s177 = smul.addr %s176, 4
          %s178 = scalar_lea.vmem %s0, %s177
          %s179 = smul.u32 4, %s20
        $region32: #{tpu_custom_call.1} parent=27 // pred_fallthru
          _
      $region28: #{tpu_custom_call.1} parent=5 // pred_fallthru
        _
      %p180 = scmp.le.s32.totalorder 1, %s13
      %p181 = scmp.lt.s32.totalorder %s13, 3
      %p182 = pnand %p180, %p181
      %p183 = pneg %p182
      // Predicated region
      $region33: #{tpu_custom_call.1} parent=5 // pred_check
        _
      $region34: #{tpu_custom_call.1} parent=5 // pred_check_branch
        %185 = sbr.rel (%p182) target = $region36
      $region35: #{tpu_custom_call.1} parent=5 // pred_region
        %s186 = ssub.s32 %s13, 1
        %s187 = smul.u32 4, %s22
        %p188 = scmp.lt.s32.totalorder %s187, 7
        %s189 = scalar_select %p188, %s187, 7
        %s190 = smul.addr %s189, 18
        %s191 = smul.addr %s190, 4
        %s192 = scalar_lea.vmem %s0, %s191
        %p193 = pneg %p51
        %p194 = pneg %p48
        %p195 = pneg %p72
        %p196 = pneg %p69
        %p197 = pneg %p93
        %p198 = pneg %p90
        %p199 = pneg %p114
        %p200 = pneg %p111
        %p201 = pneg %p142
        %p202 = pneg %p139
        %s203 = sand.u32 %s129, 1
        %s204 = scalar_lea.sflag [#allocation3], %s203
        %s205 = sand.u32 %s129, 1
        %s206 = smul.addr %s205, 64
        %s207 = scalar_lea.vmem [#allocation2], %s206
        %s208 = smul.u32 4, %s22
        %p209 = scmp.lt.s32.totalorder %s208, 7
        %s210 = scalar_select %p209, %s208, 7
        %s211 = smul.addr %s210, 18
        %s212 = smul.addr %s211, 4
        %s213 = scalar_lea.vmem %s0, %s212
        %s214 = smul.u32 4, %s22
        %s215 = smul.u32 8, %s23
        %s217 = smul.u32 %s23, 8
        %s218 = smul.u32 %s217, 2
        %s219 = smul.addr %s218, 4
        %s220 = scalar_lea.vmem %s213, %s219
        %v221 = vld [vmem:[%s220] sm:$0xf]
        %v222 = vld [vmem:[%s220 + $0x8] sm:$0xf]
        %v223 = vld [vmem:[%s220 + $0x10] sm:$0xf]
        %v224 = vld [vmem:[%s220 + $0x18] sm:$0xf]
        %v225 = vld [vmem:[%s220 + $0x20] sm:$0xf]
        %v226 = vld [vmem:[%s220 + $0x28] sm:$0xf]
        %v227 = vld [vmem:[%s220 + $0x30] sm:$0xf]
        %v228 = vld [vmem:[%s220 + $0x38] sm:$0xf]
        %v229 = vld [vmem:[%s1] sm:$0x3]
        %s230 = sadd.s32 %s218, 18
        %s231 = smul.addr %s230, 4
        %s232 = scalar_lea.vmem %s213, %s231
        %v233 = vld [vmem:[%s232] sm:$0xf]
        %v234 = vld [vmem:[%s232 + $0x8] sm:$0xf]
        %v235 = vld [vmem:[%s232 + $0x10] sm:$0xf]
        %v236 = vld [vmem:[%s232 + $0x18] sm:$0xf]
        %v237 = vld [vmem:[%s232 + $0x20] sm:$0xf]
        %v238 = vld [vmem:[%s232 + $0x28] sm:$0xf]
        %v239 = vld [vmem:[%s232 + $0x30] sm:$0xf]
        %v240 = vld [vmem:[%s232 + $0x38] sm:$0xf]
        %s241 = scalar_lea.vmem %s1, 2
        %v242 = vld [vmem:[%s241] sm:$0x3]
        %v251 = vunpack.c.l.b16 %v233
        %v252 = vunpack.c.l.b16 %v234
        %v253 = vunpack.c.l.b16 %v235
        %v254 = vunpack.c.l.b16 %v236
        %v255 = vunpack.c.l.b16 %v237
        %v256 = vunpack.c.l.b16 %v238
        %v257 = vunpack.c.l.b16 %v239
        %v258 = vunpack.c.l.b16 %v240
        %v259 = vpack.c.b16 %v252, %v251
        %v260 = vpack.c.b16 %v254, %v253
        %v261 = vpack.c.b16 %v256, %v255
        %v262 = vpack.c.b16 %v258, %v257
        %vm263 = vcmask 31744
        %v265 = vsel %vm263, %v259, 0
        %v268 = vsel %vm263, %v260, 0
        %v271 = vsel %vm263, %v261, 0
        %v274 = vsel %vm263, %v262, 0
        %vm276 = vcmask 1041408
        %v278 = vsel %vm276, %v242, 0
        %280 = vmatprep.subr.bf16.mxu0 0
        %281 = vmatpush1.bf16.msra.mxu0 %v278
        %282 = vmatprep.subr.bf16.mxu0 0
        %283 = vmatpush1.bf16.msra.mxu0 0
        %284 = vmatprep.subr.bf16.mxu0 0
        %285 = vmatpush1.bf16.msra.mxu0 0
        %286 = vmatprep.subr.bf16.mxu0 0
        %287 = vmatpush1.bf16.msra.mxu0 0
        %288 = vmatprep.subr.bf16.mxu0 0
        %289 = vmatpush1.bf16.msra.mxu0 0
        %290 = vmatprep.subr.bf16.mxu0 0
        %291 = vmatpush1.bf16.msra.mxu0 0
        %292 = vmatprep.subr.bf16.mxu0 0
        %293 = vmatpush1.bf16.msra.mxu0 0
        %294 = vmatprep.subr.bf16.mxu0 0
        %295 = vmatpush1.bf16.msra.mxu0 0
        %296 = vmatprep.subr.bf16.mxu0 0
        %297 = vmatpush1.bf16.msra.mxu0 0
        %298 = vmatprep.subr.bf16.mxu0 0
        %299 = vmatpush1.bf16.msra.mxu0 0
        %300 = vmatprep.subr.bf16.mxu0 0
        %301 = vmatpush1.bf16.msra.mxu0 0
        %302 = vmatprep.subr.bf16.mxu0 0
        %303 = vmatpush1.bf16.msra.mxu0 0
        %304 = vmatprep.subr.bf16.mxu0 0
        %305 = vmatpush1.bf16.msra.mxu0 0
        %306 = vmatprep.subr.bf16.mxu0 0
        %307 = vmatpush1.bf16.msra.mxu0 0
        %308 = vmatprep.subr.bf16.mxu0 0
        %309 = vmatpush1.bf16.msra.mxu0 0
        %310 = vmatprep.subr.bf16.mxu0 0
        %311 = vmatpush1.bf16.msra.mxu0 0
        %312 = vmatprep.mubr.bf16.mxu0 0
        %313 = vmatmul.mubr.bf16.gmra.mrb[0].mxu0 %v265
        %v314 = vpop.f32.mrb[0].mxu0
        %v315 = vadd.f32 0.0, %v314
        %v316 = vpop.f32.mrb[0].mxu0
        %v317 = vpop.f32.mrb[0].mxu0
        %v318 = vadd.f32 0.0, %v317
        %v319 = vpop.f32.mrb[0].mxu0
        %320 = vmatprep.mubr.bf16.mxu0 0
        %321 = vmatmul.mubr.bf16.gmra.mrb[0].mxu0 %v268
        %v322 = vpop.f32.mrb[0].mxu0
        %v323 = vadd.f32 0.0, %v322
        %v324 = vpop.f32.mrb[0].mxu0
        %v325 = vpop.f32.mrb[0].mxu0
        %v326 = vadd.f32 0.0, %v325
        %v327 = vpop.f32.mrb[0].mxu0
        %328 = vmatprep.mubr.bf16.mxu0 0
        %329 = vmatmul.mubr.bf16.gmra.mrb[0].mxu0 %v271
        %v330 = vpop.f32.mrb[0].mxu0
        %v331 = vadd.f32 0.0, %v330
        %v332 = vpop.f32.mrb[0].mxu0
        %v333 = vpop.f32.mrb[0].mxu0
        %v334 = vadd.f32 0.0, %v333
        %v335 = vpop.f32.mrb[0].mxu0
        %336 = vmatprep.mubr.bf16.mxu0 0
        %337 = vmatmul.mubr.bf16.gmra.mrb[0].mxu0 %v274
        %v338 = vpop.f32.mrb[0].mxu0
        %v339 = vadd.f32 0.0, %v338
        %v340 = vpop.f32.mrb[0].mxu0
        %v341 = vpop.f32.mrb[0].mxu0
        %v342 = vadd.f32 0.0, %v341
        %v343 = vpop.f32.mrb[0].mxu0
        %344 = vdwg.mxu0
        %v353 = vunpack.c.l.b16 %v221
        %v354 = vunpack.c.l.b16 %v222
        %v355 = vunpack.c.l.b16 %v223
        %v356 = vunpack.c.l.b16 %v224
        %v357 = vunpack.c.l.b16 %v225
        %v358 = vunpack.c.l.b16 %v226
        %v359 = vunpack.c.l.b16 %v227
        %v360 = vunpack.c.l.b16 %v228
        %v361 = vpack.c.b16 %v354, %v353
        %v362 = vpack.c.b16 %v356, %v355
        %v363 = vpack.c.b16 %v358, %v357
        %v364 = vpack.c.b16 %v360, %v359
        %v366 = vsel %vm263, %v361, 0
        %v369 = vsel %vm263, %v362, 0
        %v372 = vsel %vm263, %v363, 0
        %v375 = vsel %vm263, %v364, 0
        %v378 = vsel %vm276, %v229, 0
        %380 = vmatprep.subr.bf16.mxu0 0
        %381 = vmatpush1.bf16.msra.mxu0 %v378
        %382 = vmatprep.subr.bf16.mxu0 0
        %383 = vmatpush1.bf16.msra.mxu0 0
        %384 = vmatprep.subr.bf16.mxu0 0
        %385 = vmatpush1.bf16.msra.mxu0 0
        %386 = vmatprep.subr.bf16.mxu0 0
        %387 = vmatpush1.bf16.msra.mxu0 0
        %388 = vmatprep.subr.bf16.mxu0 0
        %389 = vmatpush1.bf16.msra.mxu0 0
        %390 = vmatprep.subr.bf16.mxu0 0
        %391 = vmatpush1.bf16.msra.mxu0 0
        %392 = vmatprep.subr.bf16.mxu0 0
        %393 = vmatpush1.bf16.msra.mxu0 0
        %394 = vmatprep.subr.bf16.mxu0 0
        %395 = vmatpush1.bf16.msra.mxu0 0
        %396 = vmatprep.subr.bf16.mxu0 0
        %397 = vmatpush1.bf16.msra.mxu0 0
        %398 = vmatprep.subr.bf16.mxu0 0
        %399 = vmatpush1.bf16.msra.mxu0 0
        %400 = vmatprep.subr.bf16.mxu0 0
        %401 = vmatpush1.bf16.msra.mxu0 0
        %402 = vmatprep.subr.bf16.mxu0 0
        %403 = vmatpush1.bf16.msra.mxu0 0
        %404 = vmatprep.subr.bf16.mxu0 0
        %405 = vmatpush1.bf16.msra.mxu0 0
        %406 = vmatprep.subr.bf16.mxu0 0
        %407 = vmatpush1.bf16.msra.mxu0 0
        %408 = vmatprep.subr.bf16.mxu0 0
        %409 = vmatpush1.bf16.msra.mxu0 0
        %410 = vmatprep.subr.bf16.mxu0 0
        %411 = vmatpush1.bf16.msra.mxu0 0
        %412 = vmatprep.mubr.bf16.mxu0 0
        %413 = vmatmul.mubr.bf16.gmra.mrb[0].mxu0 %v366
        %v414 = vpop.f32.mrb[0].mxu0
        %v415 = vadd.f32 %v315, %v414
        %v416 = vpop.f32.mrb[0].mxu0
        %v417 = vpop.f32.mrb[0].mxu0
        %v418 = vadd.f32 %v318, %v417
        %v419 = vpop.f32.mrb[0].mxu0
        %420 = vmatprep.mubr.bf16.mxu0 0
        %421 = vmatmul.mubr.bf16.gmra.mrb[0].mxu0 %v369
        %v422 = vpop.f32.mrb[0].mxu0
        %v423 = vadd.f32 %v323, %v422
        %v424 = vpop.f32.mrb[0].mxu0
        %v425 = vpop.f32.mrb[0].mxu0
        %v426 = vadd.f32 %v326, %v425
        %v427 = vpop.f32.mrb[0].mxu0
        %428 = vmatprep.mubr.bf16.mxu0 0
        %429 = vmatmul.mubr.bf16.gmra.mrb[0].mxu0 %v372
        %v430 = vpop.f32.mrb[0].mxu0
        %v431 = vadd.f32 %v331, %v430
        %v432 = vpop.f32.mrb[0].mxu0
        %v433 = vpop.f32.mrb[0].mxu0
        %v434 = vadd.f32 %v334, %v433
        %v435 = vpop.f32.mrb[0].mxu0
        %436 = vmatprep.mubr.bf16.mxu0 0
        %437 = vmatmul.mubr.bf16.gmra.mrb[0].mxu0 %v375
        %v438 = vpop.f32.mrb[0].mxu0
        %v439 = vadd.f32 %v339, %v438
        %v440 = vpop.f32.mrb[0].mxu0
        %v441 = vpop.f32.mrb[0].mxu0
        %v442 = vadd.f32 %v342, %v441
        %v443 = vpop.f32.mrb[0].mxu0
        %444 = vdwg.mxu0
        %v445 = vld [vmem:[%s220] sm:$0xf]
        %v446 = vld [vmem:[%s220 + $0x4] sm:$0x1]
        %v447 = vld [vmem:[%s220 + $0x8] sm:$0xf]
        %v448 = vld [vmem:[%s220 + $0xc] sm:$0x1]
        %v449 = vld [vmem:[%s220 + $0x10] sm:$0xf]
        %v450 = vld [vmem:[%s220 + $0x14] sm:$0x1]
        %v451 = vld [vmem:[%s220 + $0x18] sm:$0xf]
        %v452 = vld [vmem:[%s220 + $0x1c] sm:$0x1]
        %v453 = vld [vmem:[%s220 + $0x20] sm:$0xf]
        %v454 = vld [vmem:[%s220 + $0x24] sm:$0x1]
        %v455 = vld [vmem:[%s220 + $0x28] sm:$0xf]
        %v456 = vld [vmem:[%s220 + $0x2c] sm:$0x1]
        %v457 = vld [vmem:[%s220 + $0x30] sm:$0xf]
        %v458 = vld [vmem:[%s220 + $0x34] sm:$0x1]
        %v459 = vld [vmem:[%s220 + $0x38] sm:$0xf]
        %v460 = vld [vmem:[%s220 + $0x3c] sm:$0x1]
        %vm461 = vsmask.f32 3328
        %vm462 = vsmask.f32 7440
        %vm463 = vmor %vm461, %vm462
        %v465 = vshrl.u32 %v445, 16
        %v467 = vrot.slane %v465, 4
        %v468 = vshll.u32 %v445, 16
        %v470 = vrot.slane %v468, 5
        %v471 = vor.u32 %v467, %v470
        %v472 = vrot.slane %v471, 4
        %v474 = vshll.u32 %v446, 16
        %v476 = vrot.slane %v474, 5
        %v477 = vsel %vm463, %v472, %v476
        %v479 = vshrl.u32 %v447, 16
        %v481 = vrot.slane %v479, 4
        %v482 = vshll.u32 %v447, 16
        %v484 = vrot.slane %v482, 5
        %v485 = vor.u32 %v481, %v484
        %v486 = vrot.slane %v485, 4
        %v488 = vshll.u32 %v448, 16
        %v490 = vrot.slane %v488, 5
        %v491 = vsel %vm463, %v486, %v490
        %v493 = vshrl.u32 %v449, 16
        %v495 = vrot.slane %v493, 4
        %v496 = vshll.u32 %v449, 16
        %v498 = vrot.slane %v496, 5
        %v499 = vor.u32 %v495, %v498
        %v500 = vrot.slane %v499, 4
        %v502 = vshll.u32 %v450, 16
        %v504 = vrot.slane %v502, 5
        %v505 = vsel %vm463, %v500, %v504
        %v507 = vshrl.u32 %v451, 16
        %v509 = vrot.slane %v507, 4
        %v510 = vshll.u32 %v451, 16
        %v512 = vrot.slane %v510, 5
        %v513 = vor.u32 %v509, %v512
        %v514 = vrot.slane %v513, 4
        %v516 = vshll.u32 %v452, 16
        %v518 = vrot.slane %v516, 5
        %v519 = vsel %vm463, %v514, %v518
        %v521 = vshrl.u32 %v453, 16
        %v523 = vrot.slane %v521, 4
        %v524 = vshll.u32 %v453, 16
        %v526 = vrot.slane %v524, 5
        %v527 = vor.u32 %v523, %v526
        %v528 = vrot.slane %v527, 4
        %v530 = vshll.u32 %v454, 16
        %v532 = vrot.slane %v530, 5
        %v533 = vsel %vm463, %v528, %v532
        %v535 = vshrl.u32 %v455, 16
        %v537 = vrot.slane %v535, 4
        %v538 = vshll.u32 %v455, 16
        %v540 = vrot.slane %v538, 5
        %v541 = vor.u32 %v537, %v540
        %v542 = vrot.slane %v541, 4
        %v544 = vshll.u32 %v456, 16
        %v546 = vrot.slane %v544, 5
        %v547 = vsel %vm463, %v542, %v546
        %v549 = vshrl.u32 %v457, 16
        %v551 = vrot.slane %v549, 4
        %v552 = vshll.u32 %v457, 16
        %v554 = vrot.slane %v552, 5
        %v555 = vor.u32 %v551, %v554
        %v556 = vrot.slane %v555, 4
        %v558 = vshll.u32 %v458, 16
        %v560 = vrot.slane %v558, 5
        %v561 = vsel %vm463, %v556, %v560
        %v563 = vshrl.u32 %v459, 16
        %v565 = vrot.slane %v563, 4
        %v566 = vshll.u32 %v459, 16
        %v568 = vrot.slane %v566, 5
        %v569 = vor.u32 %v565, %v568
        %v570 = vrot.slane %v569, 4
        %v572 = vshll.u32 %v460, 16
        %v574 = vrot.slane %v572, 5
        %v575 = vsel %vm463, %v570, %v574
        %s576 = scalar_lea.vmem %s1, 4
        %v577 = vld [vmem:[%s576] sm:$0x3]
        %v578 = vunpack.c.l.b16 %v477
        %v579 = vunpack.c.l.b16 %v491
        %v580 = vunpack.c.l.b16 %v505
        %v581 = vunpack.c.l.b16 %v519
        %v582 = vunpack.c.l.b16 %v533
        %v583 = vunpack.c.l.b16 %v547
        %v584 = vunpack.c.l.b16 %v561
        %v585 = vunpack.c.l.b16 %v575
        %v586 = vpack.c.b16 %v579, %v578
        %v587 = vpack.c.b16 %v581, %v580
        %v588 = vpack.c.b16 %v583, %v582
        %v589 = vpack.c.b16 %v585, %v584
        %v591 = vsel %vm263, %v586, 0
        %v594 = vsel %vm263, %v587, 0
        %v597 = vsel %vm263, %v588, 0
        %v600 = vsel %vm263, %v589, 0
        %v603 = vsel %vm276, %v577, 0
        %605 = vmatprep.subr.bf16.mxu0 0
        %606 = vmatpush1.bf16.msra.mxu0 %v603
        %607 = vmatprep.subr.bf16.mxu0 0
        %608 = vmatpush1.bf16.msra.mxu0 0
        %609 = vmatprep.subr.bf16.mxu0 0
        %610 = vmatpush1.bf16.msra.mxu0 0
        %611 = vmatprep.subr.bf16.mxu0 0
        %612 = vmatpush1.bf16.msra.mxu0 0
        %613 = vmatprep.subr.bf16.mxu0 0
        %614 = vmatpush1.bf16.msra.mxu0 0
        %615 = vmatprep.subr.bf16.mxu0 0
        %616 = vmatpush1.bf16.msra.mxu0 0
        %617 = vmatprep.subr.bf16.mxu0 0
        %618 = vmatpush1.bf16.msra.mxu0 0
        %619 = vmatprep.subr.bf16.mxu0 0
        %620 = vmatpush1.bf16.msra.mxu0 0
        %621 = vmatprep.subr.bf16.mxu0 0
        %622 = vmatpush1.bf16.msra.mxu0 0
        %623 = vmatprep.subr.bf16.mxu0 0
        %624 = vmatpush1.bf16.msra.mxu0 0
        %625 = vmatprep.subr.bf16.mxu0 0
        %626 = vmatpush1.bf16.msra.mxu0 0
        %627 = vmatprep.subr.bf16.mxu0 0
        %628 = vmatpush1.bf16.msra.mxu0 0
        %629 = vmatprep.subr.bf16.mxu0 0
        %630 = vmatpush1.bf16.msra.mxu0 0
        %631 = vmatprep.subr.bf16.mxu0 0
        %632 = vmatpush1.bf16.msra.mxu0 0
        %633 = vmatprep.subr.bf16.mxu0 0
        %634 = vmatpush1.bf16.msra.mxu0 0
        %635 = vmatprep.subr.bf16.mxu0 0
        %636 = vmatpush1.bf16.msra.mxu0 0
        %637 = vmatprep.mubr.bf16.mxu0 0
        %638 = vmatmul.mubr.bf16.gmra.mrb[0].mxu0 %v591
        %v639 = vpop.f32.mrb[0].mxu0
        %v640 = vadd.f32 0.0, %v639
        %v641 = vpop.f32.mrb[0].mxu0
        %v642 = vpop.f32.mrb[0].mxu0
        %v643 = vadd.f32 0.0, %v642
        %v644 = vpop.f32.mrb[0].mxu0
        %645 = vmatprep.mubr.bf16.mxu0 0
        %646 = vmatmul.mubr.bf16.gmra.mrb[0].mxu0 %v594
        %v647 = vpop.f32.mrb[0].mxu0
        %v648 = vadd.f32 0.0, %v647
        %v649 = vpop.f32.mrb[0].mxu0
        %v650 = vpop.f32.mrb[0].mxu0
        %v651 = vadd.f32 0.0, %v650
        %v652 = vpop.f32.mrb[0].mxu0
        %653 = vmatprep.mubr.bf16.mxu0 0
        %654 = vmatmul.mubr.bf16.gmra.mrb[0].mxu0 %v597
        %v655 = vpop.f32.mrb[0].mxu0
        %v656 = vadd.f32 0.0, %v655
        %v657 = vpop.f32.mrb[0].mxu0
        %v658 = vpop.f32.mrb[0].mxu0
        %v659 = vadd.f32 0.0, %v658
        %v660 = vpop.f32.mrb[0].mxu0
        %661 = vmatprep.mubr.bf16.mxu0 0
        %662 = vmatmul.mubr.bf16.gmra.mrb[0].mxu0 %v600
        %v663 = vpop.f32.mrb[0].mxu0
        %v664 = vadd.f32 0.0, %v663
        %v665 = vpop.f32.mrb[0].mxu0
        %v666 = vpop.f32.mrb[0].mxu0
        %v667 = vadd.f32 0.0, %v666
        %v668 = vpop.f32.mrb[0].mxu0
        %669 = vdwg.mxu0
        %v670 = vadd.f32 %v415, %v640
        %v671 = vadd.f32 %v418, %v643
        %v672 = vadd.f32 %v423, %v648
        %v673 = vadd.f32 %v426, %v651
        %v674 = vadd.f32 %v431, %v656
        %v675 = vadd.f32 %v434, %v659
        %v676 = vadd.f32 %v439, %v664
        %v677 = vadd.f32 %v442, %v667
        %s678 = sadd.s32 %s218, 36
        %s679 = smul.addr %s678, 4
        %s680 = scalar_lea.vmem %s213, %s679
        %v681 = vld [vmem:[%s680] sm:$0xf]
        %v682 = vld [vmem:[%s680 + $0x8] sm:$0xf]
        %v683 = vld [vmem:[%s680 + $0x10] sm:$0xf]
        %v684 = vld [vmem:[%s680 + $0x18] sm:$0xf]
        %v685 = vld [vmem:[%s680 + $0x20] sm:$0xf]
        %v686 = vld [vmem:[%s680 + $0x28] sm:$0xf]
        %v687 = vld [vmem:[%s680 + $0x30] sm:$0xf]
        %v688 = vld [vmem:[%s680 + $0x38] sm:$0xf]
        %s689 = scalar_lea.vmem %s1, 6
        %v690 = vld [vmem:[%s689] sm:$0x3]
        %v699 = vunpack.c.l.b16 %v681
        %v700 = vunpack.c.l.b16 %v682
        %v701 = vunpack.c.l.b16 %v683
        %v702 = vunpack.c.l.b16 %v684
        %v703 = vunpack.c.l.b16 %v685
        %v704 = vunpack.c.l.b16 %v686
        %v705 = vunpack.c.l.b16 %v687
        %v706 = vunpack.c.l.b16 %v688
        %v707 = vpack.c.b16 %v700, %v699
        %v708 = vpack.c.b16 %v702, %v701
        %v709 = vpack.c.b16 %v704, %v703
        %v710 = vpack.c.b16 %v706, %v705
        %v712 = vsel %vm263, %v707, 0
        %v715 = vsel %vm263, %v708, 0
        %v718 = vsel %vm263, %v709, 0
        %v721 = vsel %vm263, %v710, 0
        %v724 = vsel %vm276, %v690, 0
        %726 = vmatprep.subr.bf16.mxu0 0
        %727 = vmatpush1.bf16.msra.mxu0 %v724
        %728 = vmatprep.subr.bf16.mxu0 0
        %729 = vmatpush1.bf16.msra.mxu0 0
        %730 = vmatprep.subr.bf16.mxu0 0
        %731 = vmatpush1.bf16.msra.mxu0 0
        %732 = vmatprep.subr.bf16.mxu0 0
        %733 = vmatpush1.bf16.msra.mxu0 0
        %734 = vmatprep.subr.bf16.mxu0 0
        %735 = vmatpush1.bf16.msra.mxu0 0
        %736 = vmatprep.subr.bf16.mxu0 0
        %737 = vmatpush1.bf16.msra.mxu0 0
        %738 = vmatprep.subr.bf16.mxu0 0
        %739 = vmatpush1.bf16.msra.mxu0 0
        %740 = vmatprep.subr.bf16.mxu0 0
        %741 = vmatpush1.bf16.msra.mxu0 0
        %742 = vmatprep.subr.bf16.mxu0 0
        %743 = vmatpush1.bf16.msra.mxu0 0
        %744 = vmatprep.subr.bf16.mxu0 0
        %745 = vmatpush1.bf16.msra.mxu0 0
        %746 = vmatprep.subr.bf16.mxu0 0
        %747 = vmatpush1.bf16.msra.mxu0 0
        %748 = vmatprep.subr.bf16.mxu0 0
        %749 = vmatpush1.bf16.msra.mxu0 0
        %750 = vmatprep.subr.bf16.mxu0 0
        %751 = vmatpush1.bf16.msra.mxu0 0
        %752 = vmatprep.subr.bf16.mxu0 0
        %753 = vmatpush1.bf16.msra.mxu0 0
        %754 = vmatprep.subr.bf16.mxu0 0
        %755 = vmatpush1.bf16.msra.mxu0 0
        %756 = vmatprep.subr.bf16.mxu0 0
        %757 = vmatpush1.bf16.msra.mxu0 0
        %758 = vmatprep.mubr.bf16.mxu0 0
        %759 = vmatmul.mubr.bf16.gmra.mrb[0].mxu0 %v712
        %v760 = vpop.f32.mrb[0].mxu0
        %v761 = vadd.f32 0.0, %v760
        %v762 = vpop.f32.mrb[0].mxu0
        %v763 = vpop.f32.mrb[0].mxu0
        %v764 = vadd.f32 0.0, %v763
        %v765 = vpop.f32.mrb[0].mxu0
        %766 = vmatprep.mubr.bf16.mxu0 0
        %767 = vmatmul.mubr.bf16.gmra.mrb[0].mxu0 %v715
        %v768 = vpop.f32.mrb[0].mxu0
        %v769 = vadd.f32 0.0, %v768
        %v770 = vpop.f32.mrb[0].mxu0
        %v771 = vpop.f32.mrb[0].mxu0
        %v772 = vadd.f32 0.0, %v771
        %v773 = vpop.f32.mrb[0].mxu0
        %774 = vmatprep.mubr.bf16.mxu0 0
        %775 = vmatmul.mubr.bf16.gmra.mrb[0].mxu0 %v718
        %v776 = vpop.f32.mrb[0].mxu0
        %v777 = vadd.f32 0.0, %v776
        %v778 = vpop.f32.mrb[0].mxu0
        %v779 = vpop.f32.mrb[0].mxu0
        %v780 = vadd.f32 0.0, %v779
        %v781 = vpop.f32.mrb[0].mxu0
        %782 = vmatprep.mubr.bf16.mxu0 0
        %783 = vmatmul.mubr.bf16.gmra.mrb[0].mxu0 %v721
        %v784 = vpop.f32.mrb[0].mxu0
        %v785 = vadd.f32 0.0, %v784
        %v786 = vpop.f32.mrb[0].mxu0
        %v787 = vpop.f32.mrb[0].mxu0
        %v788 = vadd.f32 0.0, %v787
        %v789 = vpop.f32.mrb[0].mxu0
        %790 = vdwg.mxu0
        %v791 = vadd.f32 %v670, %v761
        %v792 = vadd.f32 %v671, %v764
        %v793 = vadd.f32 %v672, %v769
        %v794 = vadd.f32 %v673, %v772
        %v795 = vadd.f32 %v674, %v777
        %v796 = vadd.f32 %v675, %v780
        %v797 = vadd.f32 %v676, %v785
        %v798 = vadd.f32 %v677, %v788
        %s799 = sadd.s32 %s218, 54
        %s800 = smul.addr %s799, 4
        %s801 = scalar_lea.vmem %s213, %s800
        %v802 = vld [vmem:[%s801] sm:$0xf]
        %v803 = vld [vmem:[%s801 + $0x8] sm:$0xf]
        %v804 = vld [vmem:[%s801 + $0x10] sm:$0xf]
        %v805 = vld [vmem:[%s801 + $0x18] sm:$0xf]
        %v806 = vld [vmem:[%s801 + $0x20] sm:$0xf]
        %v807 = vld [vmem:[%s801 + $0x28] sm:$0xf]
        %v808 = vld [vmem:[%s801 + $0x30] sm:$0xf]
        %v809 = vld [vmem:[%s801 + $0x38] sm:$0xf]
        %s810 = scalar_lea.vmem %s1, 8
        %v811 = vld [vmem:[%s810] sm:$0x3]
        %v820 = vunpack.c.l.b16 %v802
        %v821 = vunpack.c.l.b16 %v803
        %v822 = vunpack.c.l.b16 %v804
        %v823 = vunpack.c.l.b16 %v805
        %v824 = vunpack.c.l.b16 %v806
        %v825 = vunpack.c.l.b16 %v807
        %v826 = vunpack.c.l.b16 %v808
        %v827 = vunpack.c.l.b16 %v809
        %v828 = vpack.c.b16 %v821, %v820
        %v829 = vpack.c.b16 %v823, %v822
        %v830 = vpack.c.b16 %v825, %v824
        %v831 = vpack.c.b16 %v827, %v826
        %v833 = vsel %vm263, %v828, 0
        %v836 = vsel %vm263, %v829, 0
        %v839 = vsel %vm263, %v830, 0
        %v842 = vsel %vm263, %v831, 0
        %v845 = vsel %vm276, %v811, 0
        %847 = vmatprep.subr.bf16.mxu0 0
        %848 = vmatpush1.bf16.msra.mxu0 %v845
        %849 = vmatprep.subr.bf16.mxu0 0
        %850 = vmatpush1.bf16.msra.mxu0 0
        %851 = vmatprep.subr.bf16.mxu0 0
        %852 = vmatpush1.bf16.msra.mxu0 0
        %853 = vmatprep.subr.bf16.mxu0 0
        %854 = vmatpush1.bf16.msra.mxu0 0
        %855 = vmatprep.subr.bf16.mxu0 0
        %856 = vmatpush1.bf16.msra.mxu0 0
        %857 = vmatprep.subr.bf16.mxu0 0
        %858 = vmatpush1.bf16.msra.mxu0 0
        %859 = vmatprep.subr.bf16.mxu0 0
        %860 = vmatpush1.bf16.msra.mxu0 0
        %861 = vmatprep.subr.bf16.mxu0 0
        %862 = vmatpush1.bf16.msra.mxu0 0
        %863 = vmatprep.subr.bf16.mxu0 0
        %864 = vmatpush1.bf16.msra.mxu0 0
        %865 = vmatprep.subr.bf16.mxu0 0
        %866 = vmatpush1.bf16.msra.mxu0 0
        %867 = vmatprep.subr.bf16.mxu0 0
        %868 = vmatpush1.bf16.msra.mxu0 0
        %869 = vmatprep.subr.bf16.mxu0 0
        %870 = vmatpush1.bf16.msra.mxu0 0
        %871 = vmatprep.subr.bf16.mxu0 0
        %872 = vmatpush1.bf16.msra.mxu0 0
        %873 = vmatprep.subr.bf16.mxu0 0
        %874 = vmatpush1.bf16.msra.mxu0 0
        %875 = vmatprep.subr.bf16.mxu0 0
        %876 = vmatpush1.bf16.msra.mxu0 0
        %877 = vmatprep.subr.bf16.mxu0 0
        %878 = vmatpush1.bf16.msra.mxu0 0
        %879 = vmatprep.mubr.bf16.mxu0 0
        %880 = vmatmul.mubr.bf16.gmra.mrb[0].mxu0 %v833
        %v881 = vpop.f32.mrb[0].mxu0
        %v882 = vadd.f32 0.0, %v881
        %v883 = vpop.f32.mrb[0].mxu0
        %v884 = vpop.f32.mrb[0].mxu0
        %v885 = vadd.f32 0.0, %v884
        %v886 = vpop.f32.mrb[0].mxu0
        %887 = vmatprep.mubr.bf16.mxu0 0
        %888 = vmatmul.mubr.bf16.gmra.mrb[0].mxu0 %v836
        %v889 = vpop.f32.mrb[0].mxu0
        %v890 = vadd.f32 0.0, %v889
        %v891 = vpop.f32.mrb[0].mxu0
        %v892 = vpop.f32.mrb[0].mxu0
        %v893 = vadd.f32 0.0, %v892
        %v894 = vpop.f32.mrb[0].mxu0
        %895 = vmatprep.mubr.bf16.mxu0 0
        %896 = vmatmul.mubr.bf16.gmra.mrb[0].mxu0 %v839
        %v897 = vpop.f32.mrb[0].mxu0
        %v898 = vadd.f32 0.0, %v897
        %v899 = vpop.f32.mrb[0].mxu0
        %v900 = vpop.f32.mrb[0].mxu0
        %v901 = vadd.f32 0.0, %v900
        %v902 = vpop.f32.mrb[0].mxu0
        %903 = vmatprep.mubr.bf16.mxu0 0
        %904 = vmatmul.mubr.bf16.gmra.mrb[0].mxu0 %v842
        %v905 = vpop.f32.mrb[0].mxu0
        %v906 = vadd.f32 0.0, %v905
        %v907 = vpop.f32.mrb[0].mxu0
        %v908 = vpop.f32.mrb[0].mxu0
        %v909 = vadd.f32 0.0, %v908
        %v910 = vpop.f32.mrb[0].mxu0
        %911 = vdwg.mxu0
        %v912 = vadd.f32 %v791, %v882
        %v913 = vadd.f32 %v792, %v885
        %v914 = vadd.f32 %v793, %v890
        %v915 = vadd.f32 %v794, %v893
        %v916 = vadd.f32 %v795, %v898
        %v917 = vadd.f32 %v796, %v901
        %v918 = vadd.f32 %v797, %v906
        %v919 = vadd.f32 %v798, %v909
        %v920 = vld [vmem:[%s680] sm:$0xf]
        %v921 = vld [vmem:[%s680 + $0x4] sm:$0x1]
        %v922 = vld [vmem:[%s680 + $0x8] sm:$0xf]
        %v923 = vld [vmem:[%s680 + $0xc] sm:$0x1]
        %v924 = vld [vmem:[%s680 + $0x10] sm:$0xf]
        %v925 = vld [vmem:[%s680 + $0x14] sm:$0x1]
        %v926 = vld [vmem:[%s680 + $0x18] sm:$0xf]
        %v927 = vld [vmem:[%s680 + $0x1c] sm:$0x1]
        %v928 = vld [vmem:[%s680 + $0x20] sm:$0xf]
        %v929 = vld [vmem:[%s680 + $0x24] sm:$0x1]
        %v930 = vld [vmem:[%s680 + $0x28] sm:$0xf]
        %v931 = vld [vmem:[%s680 + $0x2c] sm:$0x1]
        %v932 = vld [vmem:[%s680 + $0x30] sm:$0xf]
        %v933 = vld [vmem:[%s680 + $0x34] sm:$0x1]
        %v934 = vld [vmem:[%s680 + $0x38] sm:$0xf]
        %v935 = vld [vmem:[%s680 + $0x3c] sm:$0x1]
        %v937 = vshrl.u32 %v920, 16
        %v939 = vrot.slane %v937, 4
        %v940 = vshll.u32 %v920, 16
        %v942 = vrot.slane %v940, 5
        %v943 = vor.u32 %v939, %v942
        %v944 = vrot.slane %v943, 4
        %v946 = vshll.u32 %v921, 16
        %v948 = vrot.slane %v946, 5
        %v949 = vsel %vm463, %v944, %v948
        %v951 = vshrl.u32 %v922, 16
        %v953 = vrot.slane %v951, 4
        %v954 = vshll.u32 %v922, 16
        %v956 = vrot.slane %v954, 5
        %v957 = vor.u32 %v953, %v956
        %v958 = vrot.slane %v957, 4
        %v960 = vshll.u32 %v923, 16
        %v962 = vrot.slane %v960, 5
        %v963 = vsel %vm463, %v958, %v962
        %v965 = vshrl.u32 %v924, 16
        %v967 = vrot.slane %v965, 4
        %v968 = vshll.u32 %v924, 16
        %v970 = vrot.slane %v968, 5
        %v971 = vor.u32 %v967, %v970
        %v972 = vrot.slane %v971, 4
        %v974 = vshll.u32 %v925, 16
        %v976 = vrot.slane %v974, 5
        %v977 = vsel %vm463, %v972, %v976
        %v979 = vshrl.u32 %v926, 16
        %v981 = vrot.slane %v979, 4
        %v982 = vshll.u32 %v926, 16
        %v984 = vrot.slane %v982, 5
        %v985 = vor.u32 %v981, %v984
        %v986 = vrot.slane %v985, 4
        %v988 = vshll.u32 %v927, 16
        %v990 = vrot.slane %v988, 5
        %v991 = vsel %vm463, %v986, %v990
        %v993 = vshrl.u32 %v928, 16
        %v995 = vrot.slane %v993, 4
        %v996 = vshll.u32 %v928, 16
        %v998 = vrot.slane %v996, 5
        %v999 = vor.u32 %v995, %v998
        %v1000 = vrot.slane %v999, 4
        %v1002 = vshll.u32 %v929, 16
        %v1004 = vrot.slane %v1002, 5
        %v1005 = vsel %vm463, %v1000, %v1004
        %v1007 = vshrl.u32 %v930, 16
        %v1009 = vrot.slane %v1007, 4
        %v1010 = vshll.u32 %v930, 16
        %v1012 = vrot.slane %v1010, 5
        %v1013 = vor.u32 %v1009, %v1012
        %v1014 = vrot.slane %v1013, 4
        %v1016 = vshll.u32 %v931, 16
        %v1018 = vrot.slane %v1016, 5
        %v1019 = vsel %vm463, %v1014, %v1018
        %v1021 = vshrl.u32 %v932, 16
        %v1023 = vrot.slane %v1021, 4
        %v1024 = vshll.u32 %v932, 16
        %v1026 = vrot.slane %v1024, 5
        %v1027 = vor.u32 %v1023, %v1026
        %v1028 = vrot.slane %v1027, 4
        %v1030 = vshll.u32 %v933, 16
        %v1032 = vrot.slane %v1030, 5
        %v1033 = vsel %vm463, %v1028, %v1032
        %v1035 = vshrl.u32 %v934, 16
        %v1037 = vrot.slane %v1035, 4
        %v1038 = vshll.u32 %v934, 16
        %v1040 = vrot.slane %v1038, 5
        %v1041 = vor.u32 %v1037, %v1040
        %v1042 = vrot.slane %v1041, 4
        %v1044 = vshll.u32 %v935, 16
        %v1046 = vrot.slane %v1044, 5
        %v1047 = vsel %vm463, %v1042, %v1046
        %s1048 = scalar_lea.vmem %s1, 10
        %v1049 = vld [vmem:[%s1048] sm:$0x3]
        %v1050 = vunpack.c.l.b16 %v949
        %v1051 = vunpack.c.l.b16 %v963
        %v1052 = vunpack.c.l.b16 %v977
        %v1053 = vunpack.c.l.b16 %v991
        %v1054 = vunpack.c.l.b16 %v1005
        %v1055 = vunpack.c.l.b16 %v1019
        %v1056 = vunpack.c.l.b16 %v1033
        %v1057 = vunpack.c.l.b16 %v1047
        %v1058 = vpack.c.b16 %v1051, %v1050
        %v1059 = vpack.c.b16 %v1053, %v1052
        %v1060 = vpack.c.b16 %v1055, %v1054
        %v1061 = vpack.c.b16 %v1057, %v1056
        %v1063 = vsel %vm263, %v1058, 0
        %v1066 = vsel %vm263, %v1059, 0
        %v1069 = vsel %vm263, %v1060, 0
        %v1072 = vsel %vm263, %v1061, 0
        %v1075 = vsel %vm276, %v1049, 0
        %1077 = vmatprep.subr.bf16.mxu0 0
        %1078 = vmatpush1.bf16.msra.mxu0 %v1075
        %1079 = vmatprep.subr.bf16.mxu0 0
        %1080 = vmatpush1.bf16.msra.mxu0 0
        %1081 = vmatprep.subr.bf16.mxu0 0
        %1082 = vmatpush1.bf16.msra.mxu0 0
        %1083 = vmatprep.subr.bf16.mxu0 0
        %1084 = vmatpush1.bf16.msra.mxu0 0
        %1085 = vmatprep.subr.bf16.mxu0 0
        %1086 = vmatpush1.bf16.msra.mxu0 0
        %1087 = vmatprep.subr.bf16.mxu0 0
        %1088 = vmatpush1.bf16.msra.mxu0 0
        %1089 = vmatprep.subr.bf16.mxu0 0
        %1090 = vmatpush1.bf16.msra.mxu0 0
        %1091 = vmatprep.subr.bf16.mxu0 0
        %1092 = vmatpush1.bf16.msra.mxu0 0
        %1093 = vmatprep.subr.bf16.mxu0 0
        %1094 = vmatpush1.bf16.msra.mxu0 0
        %1095 = vmatprep.subr.bf16.mxu0 0
        %1096 = vmatpush1.bf16.msra.mxu0 0
        %1097 = vmatprep.subr.bf16.mxu0 0
        %1098 = vmatpush1.bf16.msra.mxu0 0
        %1099 = vmatprep.subr.bf16.mxu0 0
        %1100 = vmatpush1.bf16.msra.mxu0 0
        %1101 = vmatprep.subr.bf16.mxu0 0
        %1102 = vmatpush1.bf16.msra.mxu0 0
        %1103 = vmatprep.subr.bf16.mxu0 0
        %1104 = vmatpush1.bf16.msra.mxu0 0
        %1105 = vmatprep.subr.bf16.mxu0 0
        %1106 = vmatpush1.bf16.msra.mxu0 0
        %1107 = vmatprep.subr.bf16.mxu0 0
        %1108 = vmatpush1.bf16.msra.mxu0 0
        %1109 = vmatprep.mubr.bf16.mxu0 0
        %1110 = vmatmul.mubr.bf16.gmra.mrb[0].mxu0 %v1063
        %v1111 = vpop.f32.mrb[0].mxu0
        %v1112 = vadd.f32 0.0, %v1111
        %v1113 = vpop.f32.mrb[0].mxu0
        %v1114 = vpop.f32.mrb[0].mxu0
        %v1115 = vadd.f32 0.0, %v1114
        %v1116 = vpop.f32.mrb[0].mxu0
        %1117 = vmatprep.mubr.bf16.mxu0 0
        %1118 = vmatmul.mubr.bf16.gmra.mrb[0].mxu0 %v1066
        %v1119 = vpop.f32.mrb[0].mxu0
        %v1120 = vadd.f32 0.0, %v1119
        %v1121 = vpop.f32.mrb[0].mxu0
        %v1122 = vpop.f32.mrb[0].mxu0
        %v1123 = vadd.f32 0.0, %v1122
        %v1124 = vpop.f32.mrb[0].mxu0
        %1125 = vmatprep.mubr.bf16.mxu0 0
        %1126 = vmatmul.mubr.bf16.gmra.mrb[0].mxu0 %v1069
        %v1127 = vpop.f32.mrb[0].mxu0
        %v1128 = vadd.f32 0.0, %v1127
        %v1129 = vpop.f32.mrb[0].mxu0
        %v1130 = vpop.f32.mrb[0].mxu0
        %v1131 = vadd.f32 0.0, %v1130
        %v1132 = vpop.f32.mrb[0].mxu0
        %1133 = vmatprep.mubr.bf16.mxu0 0
        %1134 = vmatmul.mubr.bf16.gmra.mrb[0].mxu0 %v1072
        %v1135 = vpop.f32.mrb[0].mxu0
        %v1136 = vadd.f32 0.0, %v1135
        %v1137 = vpop.f32.mrb[0].mxu0
        %v1138 = vpop.f32.mrb[0].mxu0
        %v1139 = vadd.f32 0.0, %v1138
        %v1140 = vpop.f32.mrb[0].mxu0
        %1141 = vdwg.mxu0
        %v1142 = vadd.f32 %v912, %v1112
        %v1143 = vadd.f32 %v913, %v1115
        %v1144 = vadd.f32 %v914, %v1120
        %v1145 = vadd.f32 %v915, %v1123
        %v1146 = vadd.f32 %v916, %v1128
        %v1147 = vadd.f32 %v917, %v1131
        %v1148 = vadd.f32 %v918, %v1136
        %v1149 = vadd.f32 %v919, %v1139
        %s1150 = sadd.s32 %s217, 1
        %s1151 = smul.u32 %s1150, 2
        %s1152 = smul.addr %s1151, 4
        %s1153 = scalar_lea.vmem %s213, %s1152
        %v1154 = vld [vmem:[%s1153] sm:$0xf]
        %v1155 = vld [vmem:[%s1153 + $0x8] sm:$0xf]
        %v1156 = vld [vmem:[%s1153 + $0x10] sm:$0xf]
        %v1157 = vld [vmem:[%s1153 + $0x18] sm:$0xf]
        %v1158 = vld [vmem:[%s1153 + $0x20] sm:$0xf]
        %v1159 = vld [vmem:[%s1153 + $0x28] sm:$0xf]
        %v1160 = vld [vmem:[%s1153 + $0x30] sm:$0xf]
        %v1161 = vld [vmem:[%s1153 + $0x38] sm:$0xf]
        %s1162 = scalar_lea.vmem %s1, 12
        %v1163 = vld [vmem:[%s1162] sm:$0x3]
        %v1172 = vunpack.c.l.b16 %v1154
        %v1173 = vunpack.c.l.b16 %v1155
        %v1174 = vunpack.c.l.b16 %v1156
        %v1175 = vunpack.c.l.b16 %v1157
        %v1176 = vunpack.c.l.b16 %v1158
        %v1177 = vunpack.c.l.b16 %v1159
        %v1178 = vunpack.c.l.b16 %v1160
        %v1179 = vunpack.c.l.b16 %v1161
        %v1180 = vpack.c.b16 %v1173, %v1172
        %v1181 = vpack.c.b16 %v1175, %v1174
        %v1182 = vpack.c.b16 %v1177, %v1176
        %v1183 = vpack.c.b16 %v1179, %v1178
        %v1185 = vsel %vm263, %v1180, 0
        %v1188 = vsel %vm263, %v1181, 0
        %v1191 = vsel %vm263, %v1182, 0
        %v1194 = vsel %vm263, %v1183, 0
        %v1197 = vsel %vm276, %v1163, 0
        %1199 = vmatprep.subr.bf16.mxu0 0
        %1200 = vmatpush1.bf16.msra.mxu0 %v1197
        %1201 = vmatprep.subr.bf16.mxu0 0
        %1202 = vmatpush1.bf16.msra.mxu0 0
        %1203 = vmatprep.subr.bf16.mxu0 0
        %1204 = vmatpush1.bf16.msra.mxu0 0
        %1205 = vmatprep.subr.bf16.mxu0 0
        %1206 = vmatpush1.bf16.msra.mxu0 0
        %1207 = vmatprep.subr.bf16.mxu0 0
        %1208 = vmatpush1.bf16.msra.mxu0 0
        %1209 = vmatprep.subr.bf16.mxu0 0
        %1210 = vmatpush1.bf16.msra.mxu0 0
        %1211 = vmatprep.subr.bf16.mxu0 0
        %1212 = vmatpush1.bf16.msra.mxu0 0
        %1213 = vmatprep.subr.bf16.mxu0 0
        %1214 = vmatpush1.bf16.msra.mxu0 0
        %1215 = vmatprep.subr.bf16.mxu0 0
        %1216 = vmatpush1.bf16.msra.mxu0 0
        %1217 = vmatprep.subr.bf16.mxu0 0
        %1218 = vmatpush1.bf16.msra.mxu0 0
        %1219 = vmatprep.subr.bf16.mxu0 0
        %1220 = vmatpush1.bf16.msra.mxu0 0
        %1221 = vmatprep.subr.bf16.mxu0 0
        %1222 = vmatpush1.bf16.msra.mxu0 0
        %1223 = vmatprep.subr.bf16.mxu0 0
        %1224 = vmatpush1.bf16.msra.mxu0 0
        %1225 = vmatprep.subr.bf16.mxu0 0
        %1226 = vmatpush1.bf16.msra.mxu0 0
        %1227 = vmatprep.subr.bf16.mxu0 0
        %1228 = vmatpush1.bf16.msra.mxu0 0
        %1229 = vmatprep.subr.bf16.mxu0 0
        %1230 = vmatpush1.bf16.msra.mxu0 0
        %1231 = vmatprep.mubr.bf16.mxu0 0
        %1232 = vmatmul.mubr.bf16.gmra.mrb[0].mxu0 %v1185
        %v1233 = vpop.f32.mrb[0].mxu0
        %v1234 = vadd.f32 0.0, %v1233
        %v1235 = vpop.f32.mrb[0].mxu0
        %v1236 = vpop.f32.mrb[0].mxu0
        %v1237 = vadd.f32 0.0, %v1236
        %v1238 = vpop.f32.mrb[0].mxu0
        %1239 = vmatprep.mubr.bf16.mxu0 0
        %1240 = vmatmul.mubr.bf16.gmra.mrb[0].mxu0 %v1188
        %v1241 = vpop.f32.mrb[0].mxu0
        %v1242 = vadd.f32 0.0, %v1241
        %v1243 = vpop.f32.mrb[0].mxu0
        %v1244 = vpop.f32.mrb[0].mxu0
        %v1245 = vadd.f32 0.0, %v1244
        %v1246 = vpop.f32.mrb[0].mxu0
        %1247 = vmatprep.mubr.bf16.mxu0 0
        %1248 = vmatmul.mubr.bf16.gmra.mrb[0].mxu0 %v1191
        %v1249 = vpop.f32.mrb[0].mxu0
        %v1250 = vadd.f32 0.0, %v1249
        %v1251 = vpop.f32.mrb[0].mxu0
        %v1252 = vpop.f32.mrb[0].mxu0
        %v1253 = vadd.f32 0.0, %v1252
        %v1254 = vpop.f32.mrb[0].mxu0
        %1255 = vmatprep.mubr.bf16.mxu0 0
        %1256 = vmatmul.mubr.bf16.gmra.mrb[0].mxu0 %v1194
        %v1257 = vpop.f32.mrb[0].mxu0
        %v1258 = vadd.f32 0.0, %v1257
        %v1259 = vpop.f32.mrb[0].mxu0
        %v1260 = vpop.f32.mrb[0].mxu0
        %v1261 = vadd.f32 0.0, %v1260
        %v1262 = vpop.f32.mrb[0].mxu0
        %1263 = vdwg.mxu0
        %v1264 = vadd.f32 %v1142, %v1234
        %v1265 = vadd.f32 %v1143, %v1237
        %v1266 = vadd.f32 %v1144, %v1242
        %v1267 = vadd.f32 %v1145, %v1245
        %v1268 = vadd.f32 %v1146, %v1250
        %v1269 = vadd.f32 %v1147, %v1253
        %v1270 = vadd.f32 %v1148, %v1258
        %v1271 = vadd.f32 %v1149, %v1261
        %s1272 = sadd.s32 %s1151, 18
        %s1273 = smul.addr %s1272, 4
        %s1274 = scalar_lea.vmem %s213, %s1273
        %v1275 = vld [vmem:[%s1274] sm:$0xf]
        %v1276 = vld [vmem:[%s1274 + $0x8] sm:$0xf]
        %v1277 = vld [vmem:[%s1274 + $0x10] sm:$0xf]
        %v1278 = vld [vmem:[%s1274 + $0x18] sm:$0xf]
        %v1279 = vld [vmem:[%s1274 + $0x20] sm:$0xf]
        %v1280 = vld [vmem:[%s1274 + $0x28] sm:$0xf]
        %v1281 = vld [vmem:[%s1274 + $0x30] sm:$0xf]
        %v1282 = vld [vmem:[%s1274 + $0x38] sm:$0xf]
        %s1283 = scalar_lea.vmem %s1, 14
        %v1284 = vld [vmem:[%s1283] sm:$0x3]
        %v1293 = vunpack.c.l.b16 %v1275
        %v1294 = vunpack.c.l.b16 %v1276
        %v1295 = vunpack.c.l.b16 %v1277
        %v1296 = vunpack.c.l.b16 %v1278
        %v1297 = vunpack.c.l.b16 %v1279
        %v1298 = vunpack.c.l.b16 %v1280
        %v1299 = vunpack.c.l.b16 %v1281
        %v1300 = vunpack.c.l.b16 %v1282
        %v1301 = vpack.c.b16 %v1294, %v1293
        %v1302 = vpack.c.b16 %v1296, %v1295
        %v1303 = vpack.c.b16 %v1298, %v1297
        %v1304 = vpack.c.b16 %v1300, %v1299
        %v1306 = vsel %vm263, %v1301, 0
        %v1309 = vsel %vm263, %v1302, 0
        %v1312 = vsel %vm263, %v1303, 0
        %v1315 = vsel %vm263, %v1304, 0
        %v1318 = vsel %vm276, %v1284, 0
        %1320 = vmatprep.subr.bf16.mxu0 0
        %1321 = vmatpush1.bf16.msra.mxu0 %v1318
        %1322 = vmatprep.subr.bf16.mxu0 0
        %1323 = vmatpush1.bf16.msra.mxu0 0
        %1324 = vmatprep.subr.bf16.mxu0 0
        %1325 = vmatpush1.bf16.msra.mxu0 0
        %1326 = vmatprep.subr.bf16.mxu0 0
        %1327 = vmatpush1.bf16.msra.mxu0 0
        %1328 = vmatprep.subr.bf16.mxu0 0
        %1329 = vmatpush1.bf16.msra.mxu0 0
        %1330 = vmatprep.subr.bf16.mxu0 0
        %1331 = vmatpush1.bf16.msra.mxu0 0
        %1332 = vmatprep.subr.bf16.mxu0 0
        %1333 = vmatpush1.bf16.msra.mxu0 0
        %1334 = vmatprep.subr.bf16.mxu0 0
        %1335 = vmatpush1.bf16.msra.mxu0 0
        %1336 = vmatprep.subr.bf16.mxu0 0
        %1337 = vmatpush1.bf16.msra.mxu0 0
        %1338 = vmatprep.subr.bf16.mxu0 0
        %1339 = vmatpush1.bf16.msra.mxu0 0
        %1340 = vmatprep.subr.bf16.mxu0 0
        %1341 = vmatpush1.bf16.msra.mxu0 0
        %1342 = vmatprep.subr.bf16.mxu0 0
        %1343 = vmatpush1.bf16.msra.mxu0 0
        %1344 = vmatprep.subr.bf16.mxu0 0
        %1345 = vmatpush1.bf16.msra.mxu0 0
        %1346 = vmatprep.subr.bf16.mxu0 0
        %1347 = vmatpush1.bf16.msra.mxu0 0
        %1348 = vmatprep.subr.bf16.mxu0 0
        %1349 = vmatpush1.bf16.msra.mxu0 0
        %1350 = vmatprep.subr.bf16.mxu0 0
        %1351 = vmatpush1.bf16.msra.mxu0 0
        %1352 = vmatprep.mubr.bf16.mxu0 0
        %1353 = vmatmul.mubr.bf16.gmra.mrb[0].mxu0 %v1306
        %v1354 = vpop.f32.mrb[0].mxu0
        %v1355 = vadd.f32 0.0, %v1354
        %v1356 = vpop.f32.mrb[0].mxu0
        %v1357 = vpop.f32.mrb[0].mxu0
        %v1358 = vadd.f32 0.0, %v1357
        %v1359 = vpop.f32.mrb[0].mxu0
        %1360 = vmatprep.mubr.bf16.mxu0 0
        %1361 = vmatmul.mubr.bf16.gmra.mrb[0].mxu0 %v1309
        %v1362 = vpop.f32.mrb[0].mxu0
        %v1363 = vadd.f32 0.0, %v1362
        %v1364 = vpop.f32.mrb[0].mxu0
        %v1365 = vpop.f32.mrb[0].mxu0
        %v1366 = vadd.f32 0.0, %v1365
        %v1367 = vpop.f32.mrb[0].mxu0
        %1368 = vmatprep.mubr.bf16.mxu0 0
        %1369 = vmatmul.mubr.bf16.gmra.mrb[0].mxu0 %v1312
        %v1370 = vpop.f32.mrb[0].mxu0
        %v1371 = vadd.f32 0.0, %v1370
        %v1372 = vpop.f32.mrb[0].mxu0
        %v1373 = vpop.f32.mrb[0].mxu0
        %v1374 = vadd.f32 0.0, %v1373
        %v1375 = vpop.f32.mrb[0].mxu0
        %1376 = vmatprep.mubr.bf16.mxu0 0
        %1377 = vmatmul.mubr.bf16.gmra.mrb[0].mxu0 %v1315
        %v1378 = vpop.f32.mrb[0].mxu0
        %v1379 = vadd.f32 0.0, %v1378
        %v1380 = vpop.f32.mrb[0].mxu0
        %v1381 = vpop.f32.mrb[0].mxu0
        %v1382 = vadd.f32 0.0, %v1381
        %v1383 = vpop.f32.mrb[0].mxu0
        %1384 = vdwg.mxu0
        %v1385 = vadd.f32 %v1264, %v1355
        %v1386 = vadd.f32 %v1265, %v1358
        %v1387 = vadd.f32 %v1266, %v1363
        %v1388 = vadd.f32 %v1267, %v1366
        %v1389 = vadd.f32 %v1268, %v1371
        %v1390 = vadd.f32 %v1269, %v1374
        %v1391 = vadd.f32 %v1270, %v1379
        %v1392 = vadd.f32 %v1271, %v1382
        %v1393 = vld [vmem:[%s1153] sm:$0xf]
        %v1394 = vld [vmem:[%s1153 + $0x4] sm:$0x1]
        %v1395 = vld [vmem:[%s1153 + $0x8] sm:$0xf]
        %v1396 = vld [vmem:[%s1153 + $0xc] sm:$0x1]
        %v1397 = vld [vmem:[%s1153 + $0x10] sm:$0xf]
        %v1398 = vld [vmem:[%s1153 + $0x14] sm:$0x1]
        %v1399 = vld [vmem:[%s1153 + $0x18] sm:$0xf]
        %v1400 = vld [vmem:[%s1153 + $0x1c] sm:$0x1]
        %v1401 = vld [vmem:[%s1153 + $0x20] sm:$0xf]
        %v1402 = vld [vmem:[%s1153 + $0x24] sm:$0x1]
        %v1403 = vld [vmem:[%s1153 + $0x28] sm:$0xf]
        %v1404 = vld [vmem:[%s1153 + $0x2c] sm:$0x1]
        %v1405 = vld [vmem:[%s1153 + $0x30] sm:$0xf]
        %v1406 = vld [vmem:[%s1153 + $0x34] sm:$0x1]
        %v1407 = vld [vmem:[%s1153 + $0x38] sm:$0xf]
        %v1408 = vld [vmem:[%s1153 + $0x3c] sm:$0x1]
        %v1410 = vshrl.u32 %v1393, 16
        %v1412 = vrot.slane %v1410, 4
        %v1413 = vshll.u32 %v1393, 16
        %v1415 = vrot.slane %v1413, 5
        %v1416 = vor.u32 %v1412, %v1415
        %v1417 = vrot.slane %v1416, 4
        %v1419 = vshll.u32 %v1394, 16
        %v1421 = vrot.slane %v1419, 5
        %v1422 = vsel %vm463, %v1417, %v1421
        %v1424 = vshrl.u32 %v1395, 16
        %v1426 = vrot.slane %v1424, 4
        %v1427 = vshll.u32 %v1395, 16
        %v1429 = vrot.slane %v1427, 5
        %v1430 = vor.u32 %v1426, %v1429
        %v1431 = vrot.slane %v1430, 4
        %v1433 = vshll.u32 %v1396, 16
        %v1435 = vrot.slane %v1433, 5
        %v1436 = vsel %vm463, %v1431, %v1435
        %v1438 = vshrl.u32 %v1397, 16
        %v1440 = vrot.slane %v1438, 4
        %v1441 = vshll.u32 %v1397, 16
        %v1443 = vrot.slane %v1441, 5
        %v1444 = vor.u32 %v1440, %v1443
        %v1445 = vrot.slane %v1444, 4
        %v1447 = vshll.u32 %v1398, 16
        %v1449 = vrot.slane %v1447, 5
        %v1450 = vsel %vm463, %v1445, %v1449
        %v1452 = vshrl.u32 %v1399, 16
        %v1454 = vrot.slane %v1452, 4
        %v1455 = vshll.u32 %v1399, 16
        %v1457 = vrot.slane %v1455, 5
        %v1458 = vor.u32 %v1454, %v1457
        %v1459 = vrot.slane %v1458, 4
        %v1461 = vshll.u32 %v1400, 16
        %v1463 = vrot.slane %v1461, 5
        %v1464 = vsel %vm463, %v1459, %v1463
        %v1466 = vshrl.u32 %v1401, 16
        %v1468 = vrot.slane %v1466, 4
        %v1469 = vshll.u32 %v1401, 16
        %v1471 = vrot.slane %v1469, 5
        %v1472 = vor.u32 %v1468, %v1471
        %v1473 = vrot.slane %v1472, 4
        %v1475 = vshll.u32 %v1402, 16
        %v1477 = vrot.slane %v1475, 5
        %v1478 = vsel %vm463, %v1473, %v1477
        %v1480 = vshrl.u32 %v1403, 16
        %v1482 = vrot.slane %v1480, 4
        %v1483 = vshll.u32 %v1403, 16
        %v1485 = vrot.slane %v1483, 5
        %v1486 = vor.u32 %v1482, %v1485
        %v1487 = vrot.slane %v1486, 4
        %v1489 = vshll.u32 %v1404, 16
        %v1491 = vrot.slane %v1489, 5
        %v1492 = vsel %vm463, %v1487, %v1491
        %v1494 = vshrl.u32 %v1405, 16
        %v1496 = vrot.slane %v1494, 4
        %v1497 = vshll.u32 %v1405, 16
        %v1499 = vrot.slane %v1497, 5
        %v1500 = vor.u32 %v1496, %v1499
        %v1501 = vrot.slane %v1500, 4
        %v1503 = vshll.u32 %v1406, 16
        %v1505 = vrot.slane %v1503, 5
        %v1506 = vsel %vm463, %v1501, %v1505
        %v1508 = vshrl.u32 %v1407, 16
        %v1510 = vrot.slane %v1508, 4
        %v1511 = vshll.u32 %v1407, 16
        %v1513 = vrot.slane %v1511, 5
        %v1514 = vor.u32 %v1510, %v1513
        %v1515 = vrot.slane %v1514, 4
        %v1517 = vshll.u32 %v1408, 16
        %v1519 = vrot.slane %v1517, 5
        %v1520 = vsel %vm463, %v1515, %v1519
        %s1521 = scalar_lea.vmem %s1, 16
        %v1522 = vld [vmem:[%s1521] sm:$0x3]
        %v1523 = vunpack.c.l.b16 %v1422
        %v1524 = vunpack.c.l.b16 %v1436
        %v1525 = vunpack.c.l.b16 %v1450
        %v1526 = vunpack.c.l.b16 %v1464
        %v1527 = vunpack.c.l.b16 %v1478
        %v1528 = vunpack.c.l.b16 %v1492
        %v1529 = vunpack.c.l.b16 %v1506
        %v1530 = vunpack.c.l.b16 %v1520
        %v1531 = vpack.c.b16 %v1524, %v1523
        %v1532 = vpack.c.b16 %v1526, %v1525
        %v1533 = vpack.c.b16 %v1528, %v1527
        %v1534 = vpack.c.b16 %v1530, %v1529
        %v1536 = vsel %vm263, %v1531, 0
        %v1539 = vsel %vm263, %v1532, 0
        %v1542 = vsel %vm263, %v1533, 0
        %v1545 = vsel %vm263, %v1534, 0
        %v1548 = vsel %vm276, %v1522, 0
        %1550 = vmatprep.subr.bf16.mxu0 0
        %1551 = vmatpush1.bf16.msra.mxu0 %v1548
        %1552 = vmatprep.subr.bf16.mxu0 0
        %1553 = vmatpush1.bf16.msra.mxu0 0
        %1554 = vmatprep.subr.bf16.mxu0 0
        %1555 = vmatpush1.bf16.msra.mxu0 0
        %1556 = vmatprep.subr.bf16.mxu0 0
        %1557 = vmatpush1.bf16.msra.mxu0 0
        %1558 = vmatprep.subr.bf16.mxu0 0
        %1559 = vmatpush1.bf16.msra.mxu0 0
        %1560 = vmatprep.subr.bf16.mxu0 0
        %1561 = vmatpush1.bf16.msra.mxu0 0
        %1562 = vmatprep.subr.bf16.mxu0 0
        %1563 = vmatpush1.bf16.msra.mxu0 0
        %1564 = vmatprep.subr.bf16.mxu0 0
        %1565 = vmatpush1.bf16.msra.mxu0 0
        %1566 = vmatprep.subr.bf16.mxu0 0
        %1567 = vmatpush1.bf16.msra.mxu0 0
        %1568 = vmatprep.subr.bf16.mxu0 0
        %1569 = vmatpush1.bf16.msra.mxu0 0
        %1570 = vmatprep.subr.bf16.mxu0 0
        %1571 = vmatpush1.bf16.msra.mxu0 0
        %1572 = vmatprep.subr.bf16.mxu0 0
        %1573 = vmatpush1.bf16.msra.mxu0 0
        %1574 = vmatprep.subr.bf16.mxu0 0
        %1575 = vmatpush1.bf16.msra.mxu0 0
        %1576 = vmatprep.subr.bf16.mxu0 0
        %1577 = vmatpush1.bf16.msra.mxu0 0
        %1578 = vmatprep.subr.bf16.mxu0 0
        %1579 = vmatpush1.bf16.msra.mxu0 0
        %1580 = vmatprep.subr.bf16.mxu0 0
        %1581 = vmatpush1.bf16.msra.mxu0 0
        %1582 = vmatprep.mubr.bf16.mxu0 0
        %1583 = vmatmul.mubr.bf16.gmra.mrb[0].mxu0 %v1536
        %v1584 = vpop.f32.mrb[0].mxu0
        %v1585 = vadd.f32 0.0, %v1584
        %v1586 = vpop.f32.mrb[0].mxu0
        %v1587 = vpop.f32.mrb[0].mxu0
        %v1588 = vadd.f32 0.0, %v1587
        %v1589 = vpop.f32.mrb[0].mxu0
        %1590 = vmatprep.mubr.bf16.mxu0 0
        %1591 = vmatmul.mubr.bf16.gmra.mrb[0].mxu0 %v1539
        %v1592 = vpop.f32.mrb[0].mxu0
        %v1593 = vadd.f32 0.0, %v1592
        %v1594 = vpop.f32.mrb[0].mxu0
        %v1595 = vpop.f32.mrb[0].mxu0
        %v1596 = vadd.f32 0.0, %v1595
        %v1597 = vpop.f32.mrb[0].mxu0
        %1598 = vmatprep.mubr.bf16.mxu0 0
        %1599 = vmatmul.mubr.bf16.gmra.mrb[0].mxu0 %v1542
        %v1600 = vpop.f32.mrb[0].mxu0
        %v1601 = vadd.f32 0.0, %v1600
        %v1602 = vpop.f32.mrb[0].mxu0
        %v1603 = vpop.f32.mrb[0].mxu0
        %v1604 = vadd.f32 0.0, %v1603
        %v1605 = vpop.f32.mrb[0].mxu0
        %1606 = vmatprep.mubr.bf16.mxu0 0
        %1607 = vmatmul.mubr.bf16.gmra.mrb[0].mxu0 %v1545
        %v1608 = vpop.f32.mrb[0].mxu0
        %v1609 = vadd.f32 0.0, %v1608
        %v1610 = vpop.f32.mrb[0].mxu0
        %v1611 = vpop.f32.mrb[0].mxu0
        %v1612 = vadd.f32 0.0, %v1611
        %v1613 = vpop.f32.mrb[0].mxu0
        %1614 = vdwg.mxu0
        %v1615 = vadd.f32 %v1385, %v1585
        %v1616 = vadd.f32 %v1386, %v1588
        %v1617 = vadd.f32 %v1387, %v1593
        %v1618 = vadd.f32 %v1388, %v1596
        %v1619 = vadd.f32 %v1389, %v1601
        %v1620 = vadd.f32 %v1390, %v1604
        %v1621 = vadd.f32 %v1391, %v1609
        %v1622 = vadd.f32 %v1392, %v1612
        %v1623 = vmax.bf16 %v221, %v233
        %v1624 = vmax.bf16 %v222, %v234
        %v1625 = vmax.bf16 %v223, %v235
        %v1626 = vmax.bf16 %v224, %v236
        %v1627 = vmax.bf16 %v225, %v237
        %v1628 = vmax.bf16 %v226, %v238
        %v1629 = vmax.bf16 %v227, %v239
        %v1630 = vmax.bf16 %v228, %v240
        %v1639 = vmax.bf16 %v1623, %v477
        %v1640 = vmax.bf16 %v1624, %v491
        %v1641 = vmax.bf16 %v1625, %v505
        %v1642 = vmax.bf16 %v1626, %v519
        %v1643 = vmax.bf16 %v1627, %v533
        %v1644 = vmax.bf16 %v1628, %v547
        %v1645 = vmax.bf16 %v1629, %v561
        %v1646 = vmax.bf16 %v1630, %v575
        %v1647 = vmax.bf16 %v1639, %v681
        %v1648 = vmax.bf16 %v1640, %v682
        %v1649 = vmax.bf16 %v1641, %v683
        %v1650 = vmax.bf16 %v1642, %v684
        %v1651 = vmax.bf16 %v1643, %v685
        %v1652 = vmax.bf16 %v1644, %v686
        %v1653 = vmax.bf16 %v1645, %v687
        %v1654 = vmax.bf16 %v1646, %v688
        %v1655 = vmax.bf16 %v1647, %v802
        %v1656 = vmax.bf16 %v1648, %v803
        %v1657 = vmax.bf16 %v1649, %v804
        %v1658 = vmax.bf16 %v1650, %v805
        %v1659 = vmax.bf16 %v1651, %v806
        %v1660 = vmax.bf16 %v1652, %v807
        %v1661 = vmax.bf16 %v1653, %v808
        %v1662 = vmax.bf16 %v1654, %v809
        %v1671 = vmax.bf16 %v1655, %v949
        %v1672 = vmax.bf16 %v1656, %v963
        %v1673 = vmax.bf16 %v1657, %v977
        %v1674 = vmax.bf16 %v1658, %v991
        %v1675 = vmax.bf16 %v1659, %v1005
        %v1676 = vmax.bf16 %v1660, %v1019
        %v1677 = vmax.bf16 %v1661, %v1033
        %v1678 = vmax.bf16 %v1662, %v1047
        %v1679 = vmax.bf16 %v1671, %v1154
        %v1680 = vmax.bf16 %v1672, %v1155
        %v1681 = vmax.bf16 %v1673, %v1156
        %v1682 = vmax.bf16 %v1674, %v1157
        %v1683 = vmax.bf16 %v1675, %v1158
        %v1684 = vmax.bf16 %v1676, %v1159
        %v1685 = vmax.bf16 %v1677, %v1160
        %v1686 = vmax.bf16 %v1678, %v1161
        %v1687 = vmax.bf16 %v1679, %v1275
        %v1688 = vmax.bf16 %v1680, %v1276
        %v1689 = vmax.bf16 %v1681, %v1277
        %v1690 = vmax.bf16 %v1682, %v1278
        %v1691 = vmax.bf16 %v1683, %v1279
        %v1692 = vmax.bf16 %v1684, %v1280
        %v1693 = vmax.bf16 %v1685, %v1281
        %v1694 = vmax.bf16 %v1686, %v1282
        %v1703 = vmax.bf16 %v1687, %v1422
        %v1704 = vmax.bf16 %v1688, %v1436
        %v1705 = vmax.bf16 %v1689, %v1450
        %v1706 = vmax.bf16 %v1690, %v1464
        %v1707 = vmax.bf16 %v1691, %v1478
        %v1708 = vmax.bf16 %v1692, %v1492
        %v1709 = vmax.bf16 %v1693, %v1506
        %v1710 = vmax.bf16 %v1694, %v1520
        %v1711 = vld [vmem:[%s2] sm:$0x3]
        %v1720 = vunpack.c.l.b16 %v1703
        %v1721 = vunpack.c.l.b16 %v1704
        %v1722 = vunpack.c.l.b16 %v1705
        %v1723 = vunpack.c.l.b16 %v1706
        %v1724 = vunpack.c.l.b16 %v1707
        %v1725 = vunpack.c.l.b16 %v1708
        %v1726 = vunpack.c.l.b16 %v1709
        %v1727 = vunpack.c.l.b16 %v1710
        %v1728 = vpack.c.b16 %v1721, %v1720
        %v1729 = vpack.c.b16 %v1723, %v1722
        %v1730 = vpack.c.b16 %v1725, %v1724
        %v1731 = vpack.c.b16 %v1727, %v1726
        %1732 = vrot.lane.b32.xlu0 %v1728, 124
        %v1733 = vpop.permute.xlu0 %1732
        %1734 = vrot.lane.b32.xlu0 %v1729, 124
        %v1735 = vpop.permute.xlu0 %1734
        %1736 = vrot.lane.b32.xlu0 %v1730, 124
        %v1737 = vpop.permute.xlu0 %1736
        %1738 = vrot.lane.b32.xlu0 %v1731, 124
        %v1739 = vpop.permute.xlu0 %1738
        %v1741 = vsel %vm263, %v1733, 0
        %v1744 = vsel %vm263, %v1735, 0
        %v1747 = vsel %vm263, %v1737, 0
        %v1750 = vsel %vm263, %v1739, 0
        %v1753 = vsel %vm276, %v1711, 0
        %1755 = vmatprep.subr.bf16.mxu0 0
        %1756 = vmatpush1.bf16.msra.mxu0 %v1753
        %1757 = vmatprep.subr.bf16.mxu0 0
        %1758 = vmatpush1.bf16.msra.mxu0 0
        %1759 = vmatprep.subr.bf16.mxu0 0
        %1760 = vmatpush1.bf16.msra.mxu0 0
        %1761 = vmatprep.subr.bf16.mxu0 0
        %1762 = vmatpush1.bf16.msra.mxu0 0
        %1763 = vmatprep.subr.bf16.mxu0 0
        %1764 = vmatpush1.bf16.msra.mxu0 0
        %1765 = vmatprep.subr.bf16.mxu0 0
        %1766 = vmatpush1.bf16.msra.mxu0 0
        %1767 = vmatprep.subr.bf16.mxu0 0
        %1768 = vmatpush1.bf16.msra.mxu0 0
        %1769 = vmatprep.subr.bf16.mxu0 0
        %1770 = vmatpush1.bf16.msra.mxu0 0
        %1771 = vmatprep.subr.bf16.mxu0 0
        %1772 = vmatpush1.bf16.msra.mxu0 0
        %1773 = vmatprep.subr.bf16.mxu0 0
        %1774 = vmatpush1.bf16.msra.mxu0 0
        %1775 = vmatprep.subr.bf16.mxu0 0
        %1776 = vmatpush1.bf16.msra.mxu0 0
        %1777 = vmatprep.subr.bf16.mxu0 0
        %1778 = vmatpush1.bf16.msra.mxu0 0
        %1779 = vmatprep.subr.bf16.mxu0 0
        %1780 = vmatpush1.bf16.msra.mxu0 0
        %1781 = vmatprep.subr.bf16.mxu0 0
        %1782 = vmatpush1.bf16.msra.mxu0 0
        %1783 = vmatprep.subr.bf16.mxu0 0
        %1784 = vmatpush1.bf16.msra.mxu0 0
        %1785 = vmatprep.subr.bf16.mxu0 0
        %1786 = vmatpush1.bf16.msra.mxu0 0
        %1787 = vmatprep.mubr.bf16.mxu0 0
        %1788 = vmatmul.mubr.bf16.gmra.mrb[0].mxu0 %v1741
        %v1789 = vpop.f32.mrb[0].mxu0
        %v1790 = vadd.f32 0.0, %v1789
        %v1791 = vpop.f32.mrb[0].mxu0
        %v1792 = vpop.f32.mrb[0].mxu0
        %v1793 = vadd.f32 0.0, %v1792
        %v1794 = vpop.f32.mrb[0].mxu0
        %1795 = vmatprep.mubr.bf16.mxu0 0
        %1796 = vmatmul.mubr.bf16.gmra.mrb[0].mxu0 %v1744
        %v1797 = vpop.f32.mrb[0].mxu0
        %v1798 = vadd.f32 0.0, %v1797
        %v1799 = vpop.f32.mrb[0].mxu0
        %v1800 = vpop.f32.mrb[0].mxu0
        %v1801 = vadd.f32 0.0, %v1800
        %v1802 = vpop.f32.mrb[0].mxu0
        %1803 = vmatprep.mubr.bf16.mxu0 0
        %1804 = vmatmul.mubr.bf16.gmra.mrb[0].mxu0 %v1747
        %v1805 = vpop.f32.mrb[0].mxu0
        %v1806 = vadd.f32 0.0, %v1805
        %v1807 = vpop.f32.mrb[0].mxu0
        %v1808 = vpop.f32.mrb[0].mxu0
        %v1809 = vadd.f32 0.0, %v1808
        %v1810 = vpop.f32.mrb[0].mxu0
        %1811 = vmatprep.mubr.bf16.mxu0 0
        %1812 = vmatmul.mubr.bf16.gmra.mrb[0].mxu0 %v1750
        %v1813 = vpop.f32.mrb[0].mxu0
        %v1814 = vadd.f32 0.0, %v1813
        %v1815 = vpop.f32.mrb[0].mxu0
        %v1816 = vpop.f32.mrb[0].mxu0
        %v1817 = vadd.f32 0.0, %v1816
        %v1818 = vpop.f32.mrb[0].mxu0
        %1819 = vdwg.mxu0
        %v1820 = vadd.f32 %v1615, %v1790
        %v1821 = vadd.f32 %v1616, %v1793
        %v1822 = vadd.f32 %v1617, %v1798
        %v1823 = vadd.f32 %v1618, %v1801
        %v1824 = vadd.f32 %v1619, %v1806
        %v1825 = vadd.f32 %v1620, %v1809
        %v1826 = vadd.f32 %v1621, %v1814
        %v1827 = vadd.f32 %v1622, %v1817
        %v1828 = vld [vmem:[%s3] sm:$0x1]
        %v1830 = vlaneseq
        %v1831 = vshrl.u32 %v1830, 7
        %v1832 = vsub.s32 0, %v1831
        %v1833 = vrot.slane %v1828, %v1832
        %v1835 = vadd.f32 %v1820, %v1833
        %v1836 = vadd.f32 %v1821, %v1833
        %v1837 = vadd.f32 %v1822, %v1833
        %v1838 = vadd.f32 %v1823, %v1833
        %v1839 = vadd.f32 %v1824, %v1833
        %v1840 = vadd.f32 %v1825, %v1833
        %v1841 = vadd.f32 %v1826, %v1833
        %v1842 = vadd.f32 %v1827, %v1833
        %v1843 = vxor.u32 %v1835, 2147483648
        %v1844 = vxor.u32 %v1836, 2147483648
        %v1845 = vxor.u32 %v1837, 2147483648
        %v1846 = vxor.u32 %v1838, 2147483648
        %v1847 = vxor.u32 %v1839, 2147483648
        %v1848 = vxor.u32 %v1840, 2147483648
        %v1849 = vxor.u32 %v1841, 2147483648
        %v1850 = vxor.u32 %v1842, 2147483648
        %v1851 = vmul.f32 %v1843, 1.442695
        %v1852 = vpow.pop %v1851
        %v1853 = vmul.f32 %v1844, 1.442695
        %v1854 = vpow.pop %v1853
        %v1855 = vmul.f32 %v1845, 1.442695
        %v1856 = vpow.pop %v1855
        %v1857 = vmul.f32 %v1846, 1.442695
        %v1858 = vpow.pop %v1857
        %v1859 = vmul.f32 %v1847, 1.442695
        %v1860 = vpow.pop %v1859
        %v1861 = vmul.f32 %v1848, 1.442695
        %v1862 = vpow.pop %v1861
        %v1863 = vmul.f32 %v1849, 1.442695
        %v1864 = vpow.pop %v1863
        %v1865 = vmul.f32 %v1850, 1.442695
        %v1866 = vpow.pop %v1865
        %v1867 = vadd.f32 %v1852, 1.0
        %v1868 = vadd.f32 %v1854, 1.0
        %v1869 = vadd.f32 %v1856, 1.0
        %v1870 = vadd.f32 %v1858, 1.0
        %v1871 = vadd.f32 %v1860, 1.0
        %v1872 = vadd.f32 %v1862, 1.0
        %v1873 = vadd.f32 %v1864, 1.0
        %v1874 = vadd.f32 %v1866, 1.0
        %v1875 = vrcp.pop %v1867
        %v1876 = vmul.f32 1.0, %v1875
        %v1877 = vrcp.pop %v1868
        %v1878 = vmul.f32 1.0, %v1877
        %v1879 = vrcp.pop %v1869
        %v1880 = vmul.f32 1.0, %v1879
        %v1881 = vrcp.pop %v1870
        %v1882 = vmul.f32 1.0, %v1881
        %v1883 = vrcp.pop %v1871
        %v1884 = vmul.f32 1.0, %v1883
        %v1885 = vrcp.pop %v1872
        %v1886 = vmul.f32 1.0, %v1885
        %v1887 = vrcp.pop %v1873
        %v1888 = vmul.f32 1.0, %v1887
        %v1889 = vrcp.pop %v1874
        %v1890 = vmul.f32 1.0, %v1889
        %v1891 = vmul.f32 %v1835, %v1876
        %v1892 = vmul.f32 %v1836, %v1878
        %v1893 = vmul.f32 %v1837, %v1880
        %v1894 = vmul.f32 %v1838, %v1882
        %v1895 = vmul.f32 %v1839, %v1884
        %v1896 = vmul.f32 %v1840, %v1886
        %v1897 = vmul.f32 %v1841, %v1888
        %v1898 = vmul.f32 %v1842, %v1890
        %vm1899 = vcmask 64512
        %1900 = vst.msk [vmem:[%s207] sm:$0xff] %vm1899, %v1891
        %1901 = vst.msk [vmem:[%s207 + $0x8] sm:$0xff] %vm1899, %v1892
        %1902 = vst.msk [vmem:[%s207 + $0x10] sm:$0xff] %vm1899, %v1893
        %1903 = vst.msk [vmem:[%s207 + $0x18] sm:$0xff] %vm1899, %v1894
        %1904 = vst.msk [vmem:[%s207 + $0x20] sm:$0xff] %vm1899, %v1895
        %1905 = vst.msk [vmem:[%s207 + $0x28] sm:$0xff] %vm1899, %v1896
        %1906 = vst.msk [vmem:[%s207 + $0x30] sm:$0xff] %vm1899, %v1897
        %1907 = vst.msk [vmem:[%s207 + $0x38] sm:$0xff] %vm1899, %v1898
        %s1908 = sand.u32 %s129, 1
        %s1909 = scalar_lea.sflag [#allocation3], %s1908
        %s1910 = sand.u32 %s129, 1
        %s1911 = smul.addr %s1910, 64
        %s1912 = scalar_lea.vmem [#allocation2], %s1911
        // Predicated region
        $region37: #{tpu_custom_call.1} parent=35 // pred_check
          %p1913 = pneg %p139
        $region38: #{tpu_custom_call.1} parent=35 // pred_check_branch
          %1915 = sbr.rel (%p1913) target = $region40
        $region39: #{tpu_custom_call.1} parent=35 // pred_region
          %s1916 = smul.u32 8, %s23
          %s1918 = ssub.s32 1024, 1024
          %1919 = vsyncadd %s1909, %s1918
          %s1920 = smul.addr %s22, 8
          %s1921 = sadd.s32 %s1916, %s1920
          %s1922 = smul.addr %s1921, 128
          %s1923 = scalar_lea.hbm %s4, %s1922
          %s1924 = sshll.u32 %s1912, 4
          %s1925 = int_to_ptr.vmem [resolvable:$true] %s1924
          %1930 = dma.vmem_to_hbm [thread:$0]  %s1925, 1024, %s1923, %s1909, 128, 128, 8
        $region40: #{tpu_custom_call.1} parent=35 // pred_fallthru
          _
      $region36: #{tpu_custom_call.1} parent=5 // pred_fallthru
        _
      %p1931 = scmp.le.s32.totalorder 2, %s13
      // Predicated region
      $region41: #{tpu_custom_call.1} parent=5 // pred_check
        %p1932 = pneg %p1931
      $region42: #{tpu_custom_call.1} parent=5 // pred_check_branch
        %1934 = sbr.rel (%p1932) target = $region44
      $region43: #{tpu_custom_call.1} parent=5 // pred_region
        %s1935 = ssub.s32 %s13, 2
        // Predicated region
        $region45: #{tpu_custom_call.1} parent=43 // pred_check
          %p1936 = pneg %p145
        $region46: #{tpu_custom_call.1} parent=43 // pred_check_branch
          %1938 = sbr.rel (%p1936) target = $region48
        $region47: #{tpu_custom_call.1} parent=43 // pred_region
          %s1939 = sand.u32 %s130, 1
          %s1940 = scalar_lea.sflag [#allocation3], %s1939
          %s1941 = sand.u32 %s130, 1
          %s1942 = smul.addr %s1941, 64
          %s1943 = scalar_lea.vmem [#allocation2], %s1942
          %1944 = dma.done %s1940, 1024
        $region48: #{tpu_custom_call.1} parent=43 // pred_fallthru
          _
      $region44: #{tpu_custom_call.1} parent=5 // pred_fallthru
        _
    $region6: #{tpu_custom_call.1} parent=1 // loop_footer
      %s17 = sadd.s32 1, %s13
    $region7: #{tpu_custom_call.1} parent=1 // loop_footer_branch
      %12 = sbr.rel target = $region3
    $region8: #{tpu_custom_call.1} parent=1 // loop_exit
      _
    %1945 = vsyncpa [#allocation3], 1
    %s1946 = scalar_lea.sflag [#allocation3], 1
    %1947 = vsyncpa %s1946, 1

</llo_original>
